<compile_context>
chip_gen: v5e
topology: v5e:2x2
jax: 0.10.0
libtpu: 0.0.40
codegen_flags: <defaults>
</compile_context>

<pallas_src>
import jax
import jax.numpy as jnp
from jax.experimental import pallas as pl
from jax.experimental.pallas import tpu as pltpu

WINDOW_SIZE = 11
SIGMA = 1.5
C1 = 0.01 ** 2
C2 = 0.03 ** 2
N_OPS = 5  # p1, p2, p1*p1, p2*p2, p1*p2


def gaussian_1d(window_size=WINDOW_SIZE, sigma=SIGMA):
    """Matches gaussian() in the PyTorch module (centered at window_size/2 = 5.5)."""
    xs = jnp.arange(window_size, dtype=jnp.float32)
    g = jnp.exp(-((xs - window_size / 2.0) ** 2) / (2.0 * sigma ** 2))
    return g / jnp.sum(g)


def _band_same(g, n):
    """(n, n) matrix M with M @ x == 'same' cross-correlation of x with g (zero pad)."""
    k = g.shape[0]
    pad = k // 2
    rows = jnp.arange(n)[:, None]
    cols = jnp.arange(n)[None, :]
    idx = cols - rows + pad
    valid = (idx >= 0) & (idx < k)
    return jnp.where(valid, g[jnp.clip(idx, 0, k - 1)], 0.0).astype(jnp.float32)


def _pick_m_tile(n_maps, w, max_lanes=512):
    """Divisor m of n_maps with m*w <= max_lanes, preferring >= 2 grid steps."""
    divs = [m for m in range(1, n_maps + 1) if n_maps % m == 0 and m * w <= max_lanes]
    if not divs:
        return 1
    multi = [m for m in divs if n_maps // m >= 2]  # keep both v7x TCs busy
    return max(multi) if multi else max(divs)


def _ssim_kernel(a5_ref, b_ref, x1_ref, x2_ref, o_ref):
    # a5_ref : (5H, 5H)   block-diagonal row-conv weights (I_5 (x) A), f32
    # b_ref  : (MW, MW)   block-diagonal column-conv weights (I_m (x) B), f32
    # x*_ref : (1, H, MW) m_tile maps packed along the lane axis, f32
    # o_ref  : (1, PR, MW) per-tile partial sums (lane-dense)
    p1 = x1_ref[0]
    p2 = x2_ref[0]
    h = p1.shape[0]

    # Stack the five conv operands along the sublane axis: (5H, MW).
    wide = jnp.concatenate([p1, p2, p1 * p1, p2 * p2, p1 * p2], axis=0)

    # Separable Gaussian "same" conv of all five operands in two MXU matmuls.
    f32 = jnp.float32
    hp = jax.lax.Precision.HIGHEST
    t = jnp.dot(a5_ref[...], wide, precision=hp, preferred_element_type=f32)
    conv = jnp.dot(t, b_ref[...], precision=hp, preferred_element_type=f32)

    mu1 = conv[0 * h:1 * h]
    mu2 = conv[1 * h:2 * h]
    e11 = conv[2 * h:3 * h]
    e22 = conv[3 * h:4 * h]
    e12 = conv[4 * h:5 * h]

    mu1_sq = mu1 * mu1
    mu2_sq = mu2 * mu2
    mu1_mu2 = mu1 * mu2
    sigma1_sq = e11 - mu1_sq
    sigma2_sq = e22 - mu2_sq
    sigma12 = e12 - mu1_mu2

    num = (2.0 * mu1_mu2 + C1) * (2.0 * sigma12 + C2)
    den = (mu1_sq + mu2_sq + C1) * (sigma1_sq + sigma2_sq + C2)
    inv = pl.reciprocal(den, approx=True)       # EUP slot (otherwise idle)
    inv = inv * (2.0 - den * inv)               # one Newton step: error << 2e-3
    ssim_map = num * inv                        # (H, MW), lane-dense

    # Fold sublanes down to the partial-sum tile; full reduction in the wrapper.
    pr = o_ref.shape[1]
    acc = ssim_map[0:pr]
    for r in range(pr, h, pr):
        acc = acc + ssim_map[r:r + pr]
    o_ref[0] = acc


def ssim_pallas(img1, img2, window_size=WINDOW_SIZE):
    """size_average=True, mask=None  ->  scalar ssim_map.mean()."""
    B, C, H, W = img1.shape
    n_maps = B * C

    m_tile = _pick_m_tile(n_maps, W)        # maps packed per grid step
    nt = n_maps // m_tile
    mw = m_tile * W
    pr = 8 if H % 8 == 0 else H             # rows kept in the partial sums

    g = gaussian_1d(window_size)
    a_h = _band_same(g, H)                                           # (H, H)
    a5 = jnp.kron(jnp.eye(N_OPS, dtype=jnp.float32), a_h)            # (5H, 5H)
    b_w = _band_same(g, W).T                                         # (W, W)
    b_blk = jnp.kron(jnp.eye(m_tile, dtype=jnp.float32), b_w)        # (MW, MW)

    def prep(x):
        x = x.astype(jnp.float32).reshape(n_maps, H, W)
        # pack m_tile maps side-by-side along the lane axis (no padding pass)
        x = x.reshape(nt, m_tile, H, W).transpose(0, 2, 1, 3)
        return x.reshape(nt, H, mw)

    x1 = prep(img1)
    x2 = prep(img2)

    partials = pl.pallas_call(
        _ssim_kernel,
        out_shape=jax.ShapeDtypeStruct((nt, pr, mw), jnp.float32),
        grid=(nt,),
        in_specs=[
            pl.BlockSpec((N_OPS * H, N_OPS * H), lambda t: (0, 0)),
            pl.BlockSpec((mw, mw), lambda t: (0, 0)),
            pl.BlockSpec((1, H, mw), lambda t: (t, 0, 0)),
            pl.BlockSpec((1, H, mw), lambda t: (t, 0, 0)),
        ],
        out_specs=pl.BlockSpec((1, pr, mw), lambda t: (t, 0, 0)),
        compiler_params=pltpu.CompilerParams(
            dimension_semantics=("parallel",)),
    )(a5, b_blk, x1, x2)

    return jnp.sum(partials) / jnp.float32(n_maps * H * W)


def ssim_reference(img1, img2, window_size=WINDOW_SIZE):
    """Pure-JAX reference of the PyTorch forward (direct 121-tap conv)."""
    B, C, H, W = img1.shape
    K = window_size
    pad = K // 2
    g = gaussian_1d(K)
    win = jnp.outer(g, g)

    def padmap(x):
        return jnp.pad(x.astype(jnp.float32).reshape(B * C, H, W),
                       ((0, 0), (pad, pad), (pad, pad)))

    def conv(x):
        acc = jnp.zeros((B * C, H, W), jnp.float32)
        for i in range(K):
            for j in range(K):
                acc = acc + win[i, j] * x[:, i:i + H, j:j + W]
        return acc

    p1, p2 = padmap(img1), padmap(img2)
    mu1, mu2 = conv(p1), conv(p2)
    mu1_sq, mu2_sq, mu1_mu2 = mu1 * mu1, mu2 * mu2, mu1 * mu2
    sigma1_sq = conv(p1 * p1) - mu1_sq
    sigma2_sq = conv(p2 * p2) - mu2_sq
    sigma12 = conv(p1 * p2) - mu1_mu2
    ssim_map = ((2 * mu1_mu2 + C1) * (2 * sigma12 + C2)) / (
        (mu1_sq + mu2_sq + C1) * (sigma1_sq + sigma2_sq + C2))
    return ssim_map.mean()


if __name__ == "__main__":
    key = jax.random.PRNGKey(0)
    k1, k2 = jax.random.split(key)
    img1 = jax.random.uniform(k1, (2, 4, 16, 16), dtype=jnp.float32)
    img2 = jax.random.uniform(k2, (2, 4, 16, 16), dtype=jnp.float32)

    out = jax.block_until_ready(ssim_pallas(img1, img2))
    ref = jax.block_until_ready(ssim_reference(img1, img2))

    assert jnp.isfinite(out), "non-finite SSIM"
    assert abs(float(out) - float(ref)) < 2e-3, (float(out), float(ref))
    print("KERNEL_OK")
</pallas_src>

<mosaic_0001>
module attributes {stable_mosaic.version = 11 : i64} {
  func.func @_ssim_kernel(%arg0: i32, %arg1: memref<80x80xf32, #tpu.memory_space<vmem>>, %arg2: memref<64x64xf32, #tpu.memory_space<vmem>>, %arg3: memref<1x16x64xf32, #tpu.memory_space<vmem>>, %arg4: memref<1x16x64xf32, #tpu.memory_space<vmem>>, %arg5: memref<1x8x64xf32, #tpu.memory_space<vmem>>) attributes {dimension_semantics = [#tpu.dimension_semantics<parallel>], iteration_bounds = array<i64: 2>, scalar_prefetch = 0 : i64, scratch_operands = 0 : i64, tpu.core_type = #tpu.core_type<tc>, window_params = [{pipeline_mode = #tpu.pipeline_mode<synchronous>, transform_indices = @transform_0, window_bounds = array<i64: 80, 80>}, {pipeline_mode = #tpu.pipeline_mode<synchronous>, transform_indices = @transform_1, window_bounds = array<i64: 64, 64>}, {transform_indices = @transform_2, window_bounds = array<i64: 1, 16, 64>}, {transform_indices = @transform_3, window_bounds = array<i64: 1, 16, 64>}, {transform_indices = @transform_4, window_bounds = array<i64: 1, 8, 64>}]} {
    %c0 = arith.constant 0 : index
    %c0_0 = arith.constant 0 : index
    %c0_1 = arith.constant 0 : index
    %0 = vector.load %arg3[%c0, %c0_0, %c0_1] : memref<1x16x64xf32, #tpu.memory_space<vmem>>, vector<1x16x64xf32>
    %1 = vector.shape_cast %0 : vector<1x16x64xf32> to vector<16x64xf32>
    %c0_2 = arith.constant 0 : index
    %c0_3 = arith.constant 0 : index
    %c0_4 = arith.constant 0 : index
    %2 = vector.load %arg4[%c0_2, %c0_3, %c0_4] : memref<1x16x64xf32, #tpu.memory_space<vmem>>, vector<1x16x64xf32>
    %3 = vector.shape_cast %2 : vector<1x16x64xf32> to vector<16x64xf32>
    %4 = arith.mulf %1, %1 : vector<16x64xf32>
    %5 = arith.mulf %3, %3 : vector<16x64xf32>
    %6 = arith.mulf %1, %3 : vector<16x64xf32>
    %7 = tpu.concatenate %1, %3, %4, %5, %6 in 0 : vector<16x64xf32>, vector<16x64xf32>, vector<16x64xf32>, vector<16x64xf32>, vector<16x64xf32> -> vector<80x64xf32>
    %c0_5 = arith.constant 0 : index
    %c0_6 = arith.constant 0 : index
    %8 = vector.load %arg1[%c0_5, %c0_6] : memref<80x80xf32, #tpu.memory_space<vmem>>, vector<80x80xf32>
    %cst = arith.constant dense<0.000000e+00> : vector<80x64xf32>
    %9 = tpu.matmul %8, %7, %cst {dimension_numbers = #tpu.dot_dimension_numbers<[1], [0], [0], [1], [0, 0, 1, 1], [], []>, precision = #tpu.contract_precision<fp32>} : vector<80x80xf32>, vector<80x64xf32>, vector<80x64xf32> -> vector<80x64xf32>
    %c0_7 = arith.constant 0 : index
    %c0_8 = arith.constant 0 : index
    %10 = vector.load %arg2[%c0_7, %c0_8] : memref<64x64xf32, #tpu.memory_space<vmem>>, vector<64x64xf32>
    %cst_9 = arith.constant dense<0.000000e+00> : vector<80x64xf32>
    %11 = tpu.matmul %9, %10, %cst_9 {dimension_numbers = #tpu.dot_dimension_numbers<[1], [0], [0], [1], [0, 0, 1, 1], [], []>, precision = #tpu.contract_precision<fp32>} : vector<80x64xf32>, vector<64x64xf32>, vector<80x64xf32> -> vector<80x64xf32>
    %12 = vector.extract_strided_slice %11 {offsets = [0, 0], sizes = [16, 64], strides = [1, 1]} : vector<80x64xf32> to vector<16x64xf32>
    %13 = vector.extract_strided_slice %11 {offsets = [16, 0], sizes = [16, 64], strides = [1, 1]} : vector<80x64xf32> to vector<16x64xf32>
    %14 = vector.extract_strided_slice %11 {offsets = [32, 0], sizes = [16, 64], strides = [1, 1]} : vector<80x64xf32> to vector<16x64xf32>
    %15 = vector.extract_strided_slice %11 {offsets = [48, 0], sizes = [16, 64], strides = [1, 1]} : vector<80x64xf32> to vector<16x64xf32>
    %16 = vector.extract_strided_slice %11 {offsets = [64, 0], sizes = [16, 64], strides = [1, 1]} : vector<80x64xf32> to vector<16x64xf32>
    %17 = arith.mulf %12, %12 : vector<16x64xf32>
    %18 = arith.mulf %13, %13 : vector<16x64xf32>
    %19 = arith.mulf %12, %13 : vector<16x64xf32>
    %20 = arith.subf %14, %17 : vector<16x64xf32>
    %21 = arith.subf %15, %18 : vector<16x64xf32>
    %22 = arith.subf %16, %19 : vector<16x64xf32>
    %cst_10 = arith.constant 2.000000e+00 : f32
    %23 = vector.broadcast %cst_10 : f32 to vector<16x64xf32>
    %24 = arith.mulf %23, %19 : vector<16x64xf32>
    %cst_11 = arith.constant 9.99999974E-5 : f32
    %25 = vector.broadcast %cst_11 : f32 to vector<16x64xf32>
    %26 = arith.addf %24, %25 : vector<16x64xf32>
    %cst_12 = arith.constant 2.000000e+00 : f32
    %27 = vector.broadcast %cst_12 : f32 to vector<16x64xf32>
    %28 = arith.mulf %27, %22 : vector<16x64xf32>
    %cst_13 = arith.constant 8.99999984E-4 : f32
    %29 = vector.broadcast %cst_13 : f32 to vector<16x64xf32>
    %30 = arith.addf %28, %29 : vector<16x64xf32>
    %31 = arith.mulf %26, %30 : vector<16x64xf32>
    %32 = arith.addf %17, %18 : vector<16x64xf32>
    %cst_14 = arith.constant 9.99999974E-5 : f32
    %33 = vector.broadcast %cst_14 : f32 to vector<16x64xf32>
    %34 = arith.addf %32, %33 : vector<16x64xf32>
    %35 = arith.addf %20, %21 : vector<16x64xf32>
    %cst_15 = arith.constant 8.99999984E-4 : f32
    %36 = vector.broadcast %cst_15 : f32 to vector<16x64xf32>
    %37 = arith.addf %35, %36 : vector<16x64xf32>
    %38 = arith.mulf %34, %37 : vector<16x64xf32>
    %39 = tpu.reciprocal %38 {approx = true} : vector<16x64xf32> -> vector<16x64xf32>
    %40 = arith.mulf %38, %39 : vector<16x64xf32>
    %cst_16 = arith.constant 2.000000e+00 : f32
    %41 = vector.broadcast %cst_16 : f32 to vector<16x64xf32>
    %42 = arith.subf %41, %40 : vector<16x64xf32>
    %43 = arith.mulf %39, %42 : vector<16x64xf32>
    %44 = arith.mulf %31, %43 : vector<16x64xf32>
    %45 = vector.extract_strided_slice %44 {offsets = [0, 0], sizes = [8, 64], strides = [1, 1]} : vector<16x64xf32> to vector<8x64xf32>
    %46 = vector.extract_strided_slice %44 {offsets = [8, 0], sizes = [8, 64], strides = [1, 1]} : vector<16x64xf32> to vector<8x64xf32>
    %47 = arith.addf %45, %46 : vector<8x64xf32>
    %c0_17 = arith.constant 0 : index
    %c0_18 = arith.constant 0 : index
    %c0_19 = arith.constant 0 : index
    %48 = vector.load %arg5[%c0_17, %c0_18, %c0_19] : memref<1x8x64xf32, #tpu.memory_space<vmem>>, vector<1x8x64xf32>
    %49 = vector.shape_cast %48 : vector<1x8x64xf32> to vector<8x64xf32>
    %50 = vector.shape_cast %47 : vector<8x64xf32> to vector<1x8x64xf32>
    tpu.vector_store %arg5[%c0_17, %c0_18, %c0_19], %50 {strides = array<i32>} : memref<1x8x64xf32, #tpu.memory_space<vmem>>, vector<1x8x64xf32>,
    return
  }
  func.func @transform_0(%arg0: i32) -> (i32, i32) {
    %c0_i32 = arith.constant 0 : i32
    %c0_i32_0 = arith.constant 0 : i32
    %c0_i32_1 = arith.constant 0 : i32
    return %c0_i32, %c0_i32_0 : i32, i32
  }
  func.func @transform_1(%arg0: i32) -> (i32, i32) {
    %c0_i32 = arith.constant 0 : i32
    %c0_i32_0 = arith.constant 0 : i32
    %c0_i32_1 = arith.constant 0 : i32
    return %c0_i32, %c0_i32_0 : i32, i32
  }
  func.func @transform_2(%arg0: i32) -> (i32, i32, i32) {
    %c0_i32 = arith.constant 0 : i32
    %c0_i32_0 = arith.constant 0 : i32
    %c0_i32_1 = arith.constant 0 : i32
    return %arg0, %c0_i32, %c0_i32_0 : i32, i32, i32
  }
  func.func @transform_3(%arg0: i32) -> (i32, i32, i32) {
    %c0_i32 = arith.constant 0 : i32
    %c0_i32_0 = arith.constant 0 : i32
    %c0_i32_1 = arith.constant 0 : i32
    return %arg0, %c0_i32, %c0_i32_0 : i32, i32, i32
  }
  func.func @transform_4(%arg0: i32) -> (i32, i32, i32) {
    %c0_i32 = arith.constant 0 : i32
    %c0_i32_0 = arith.constant 0 : i32
    %c0_i32_1 = arith.constant 0 : i32
    return %arg0, %c0_i32, %c0_i32_0 : i32, i32, i32
  }
}

</mosaic_0001>

<llo_original>
// kernel: tpu_custom_call.1
$region0: #{tpu_custom_call.1}
  #allocation0 [shape = 'u32[]', space=smem, size = 0x4, offset = 0x4, fixed_abs, tag = 'smem constant byte address 0x4 - core index']
  #allocation1 [shape = 'u32[72,128]{1,0:T(1,128)}', space=vmem, size = 0x9000, scoped, tag = 'internal scratch']
  %s0 = inlined_call_operand.hbm [shape: f32[80,80], index: 0, kind: input, shape index: {}]
  %s1 = inlined_call_operand.hbm [shape: f32[64,64], index: 1, kind: input, shape index: {}]
  %s2 = inlined_call_operand.hbm [shape: f32[2,16,64], index: 2, kind: input, shape index: {}]
  %s3 = inlined_call_operand.hbm [shape: f32[2,16,64], index: 3, kind: input, shape index: {}]
  %s4 = inlined_call_operand.hbm [shape: f32[2,8,64], index: 4, kind: output, shape index: {}]
  %s5 = sld [smem:[#allocation0]]
  $region65: #{tpu_custom_call.1} parent=0
    _
  %s7 = ssub.s32 1, %s5
  %s8 = scalar_select 0, %s7, %s5
  $region1: #{tpu_custom_call.1} parent=0
    #allocation2 [shape = 'u8[40960]{0}', space=vmem, size = 0xa000, scoped, tag = 'input window, operand 0, single buffered']
    #allocation3 [shape = 's32[2]{0}', space=sflag, size = 0x8, scoped, tag = 'scoped memory for tpu_custom_call.1']
    #allocation4 [shape = 's32[2]{0}', space=sflag, size = 0x8, scoped, tag = 'scoped memory for tpu_custom_call.1']
    #allocation5 [shape = 'u8[32768]{0}', space=vmem, size = 0x8000, scoped, tag = 'input window, operand 1, single buffered']
    #allocation6 [shape = 's32[1]{0}', space=sflag, size = 0x4, scoped, tag = 'scoped memory for tpu_custom_call.1']
    #allocation7 [shape = 'u8[16384]{0}', space=vmem, size = 0x4000, scoped, tag = 'input window, operand 2']
    #allocation8 [shape = 'u8[16384]{0}', space=vmem, size = 0x4000, scoped, tag = 'input window, operand 3']
    #allocation9 [shape = 'u8[8192]{0}', space=vmem, size = 0x2000, scoped, tag = 'output window, operand 0']
    %9 = vsyncpa [#allocation3], 0
    %10 = vsyncpa [#allocation6], 0
    %11 = vsyncpa [#allocation4], 0
    %s12 = scalar_lea.sflag [#allocation4], 1
    %13 = vsyncpa %s12, 0
    loop: start=0, step=1, limit=4
    $region2: #{tpu_custom_call.1} parent=1 // loop_pre_header
      _
    $region3: #{tpu_custom_call.1} parent=1 // loop_header
      %s15 = sphi 0, %s19
      %p16 = scmp.ge.s32.totalorder %s15, 4
      %s23 = sphi 0, %s23
      %s25 = sphi 0, %s23
      %s26 = sphi 0, %s25
      %s40 = sphi 0, %s26
      %s44 = sphi 0, %s44
      %s46 = sphi 0, %s44
      %s47 = sphi 0, %s46
      %s61 = sphi 0, %s47
      %s67 = sphi 0, %s69
      %s70 = sphi 0, %s67
      %s71 = sphi 0, %s70
      %s87 = sphi 0, %s71
      %s93 = sphi 0, %s95
      %s96 = sphi 0, %s93
      %s97 = sphi 0, %s96
      %s113 = sphi 0, %s97
      %s119 = sphi 0, %s121
      %s122 = sphi 0, %s119
      %s123 = sphi 0, %s122
      %s139 = sphi 0, %s123
    $region4: #{tpu_custom_call.1} parent=1 // loop_header_branch
      %18 = sbr.rel (%p16) target = $region8
    $region5: #{tpu_custom_call.1} parent=1 // loop_body
      %s20 = ssub.s32 %s15, 1
      %s21 = ssub.s32 %s15, 2
      %s22 = sadd.s32 %s15, 1
      %s24 = sadd.s32 %s23, 1
      %p27 = scmp.eq.s32.totalorder %s15, 1
      %p28 = scmp.ne.s32.totalorder %s23, %s25
      %p29 = scmp.eq.s32.totalorder %s15, 0
      %p30 = por %p28, %p29
      %p31 = scmp.ne.s32.totalorder %s23, %s25
      %p32 = scmp.eq.s32.totalorder %s20, 1
      %p33 = por %p31, %p32
      %p34 = scmp.ne.s32.totalorder %s25, %s26
      %p35 = scmp.eq.s32.totalorder %s20, 0
      %p36 = por %p34, %p35
      %p37 = scmp.ne.s32.totalorder %s25, %s26
      %p38 = scmp.eq.s32.totalorder %s21, 1
      %p39 = por %p37, %p38
      %p41 = scmp.ne.s32.totalorder %s26, %s40
      %p42 = scmp.eq.s32.totalorder %s21, 0
      %p43 = por %p41, %p42
      %s45 = sadd.s32 %s44, 1
      %p48 = scmp.eq.s32.totalorder %s15, 1
      %p49 = scmp.ne.s32.totalorder %s44, %s46
      %p50 = scmp.eq.s32.totalorder %s15, 0
      %p51 = por %p49, %p50
      %p52 = scmp.ne.s32.totalorder %s44, %s46
      %p53 = scmp.eq.s32.totalorder %s20, 1
      %p54 = por %p52, %p53
      %p55 = scmp.ne.s32.totalorder %s46, %s47
      %p56 = scmp.eq.s32.totalorder %s20, 0
      %p57 = por %p55, %p56
      %p58 = scmp.ne.s32.totalorder %s46, %s47
      %p59 = scmp.eq.s32.totalorder %s21, 1
      %p60 = por %p58, %p59
      %p62 = scmp.ne.s32.totalorder %s47, %s61
      %p63 = scmp.eq.s32.totalorder %s21, 0
      %p64 = por %p62, %p63
      %s65 = ssub.s32 %s15, %s22
      %p66 = scmp.eq.s32.totalorder %s65, 0
      %s68 = sadd.s32 %s67, 1
      %s69 = scalar_select %p66, %s67, %s68
      %p72 = pneg %p66
      %p73 = scmp.eq.s32.totalorder %s15, 1
      %p74 = por %p72, %p73
      %p75 = scmp.ne.s32.totalorder %s67, %s70
      %p76 = scmp.eq.s32.totalorder %s15, 0
      %p77 = por %p75, %p76
      %p78 = scmp.ne.s32.totalorder %s67, %s70
      %p79 = scmp.eq.s32.totalorder %s20, 1
      %p80 = por %p78, %p79
      %p81 = scmp.ne.s32.totalorder %s70, %s71
      %p82 = scmp.eq.s32.totalorder %s20, 0
      %p83 = por %p81, %p82
      %p84 = scmp.ne.s32.totalorder %s70, %s71
      %p85 = scmp.eq.s32.totalorder %s21, 1
      %p86 = por %p84, %p85
      %p88 = scmp.ne.s32.totalorder %s71, %s87
      %p89 = scmp.eq.s32.totalorder %s21, 0
      %p90 = por %p88, %p89
      %s91 = ssub.s32 %s15, %s22
      %p92 = scmp.eq.s32.totalorder %s91, 0
      %s94 = sadd.s32 %s93, 1
      %s95 = scalar_select %p92, %s93, %s94
      %p98 = pneg %p92
      %p99 = scmp.eq.s32.totalorder %s15, 1
      %p100 = por %p98, %p99
      %p101 = scmp.ne.s32.totalorder %s93, %s96
      %p102 = scmp.eq.s32.totalorder %s15, 0
      %p103 = por %p101, %p102
      %p104 = scmp.ne.s32.totalorder %s93, %s96
      %p105 = scmp.eq.s32.totalorder %s20, 1
      %p106 = por %p104, %p105
      %p107 = scmp.ne.s32.totalorder %s96, %s97
      %p108 = scmp.eq.s32.totalorder %s20, 0
      %p109 = por %p107, %p108
      %p110 = scmp.ne.s32.totalorder %s96, %s97
      %p111 = scmp.eq.s32.totalorder %s21, 1
      %p112 = por %p110, %p111
      %p114 = scmp.ne.s32.totalorder %s97, %s113
      %p115 = scmp.eq.s32.totalorder %s21, 0
      %p116 = por %p114, %p115
      %s117 = ssub.s32 %s15, %s22
      %p118 = scmp.eq.s32.totalorder %s117, 0
      %s120 = sadd.s32 %s119, 1
      %s121 = scalar_select %p118, %s119, %s120
      %p124 = pneg %p118
      %p125 = scmp.eq.s32.totalorder %s15, 1
      %p126 = por %p124, %p125
      %p127 = scmp.ne.s32.totalorder %s119, %s122
      %p128 = scmp.eq.s32.totalorder %s15, 0
      %p129 = por %p127, %p128
      %p130 = scmp.ne.s32.totalorder %s119, %s122
      %p131 = scmp.eq.s32.totalorder %s20, 1
      %p132 = por %p130, %p131
      %p133 = scmp.ne.s32.totalorder %s122, %s123
      %p134 = scmp.eq.s32.totalorder %s20, 0
      %p135 = por %p133, %p134
      %p136 = scmp.ne.s32.totalorder %s122, %s123
      %p137 = scmp.eq.s32.totalorder %s21, 1
      %p138 = por %p136, %p137
      %p140 = scmp.ne.s32.totalorder %s123, %s139
      %p141 = scmp.eq.s32.totalorder %s21, 0
      %p142 = por %p140, %p141
      %p143 = scmp.le.s32.totalorder 1, %s15
      %p144 = scmp.lt.s32.totalorder %s15, 3
      %p145 = pnand %p143, %p144
      %p146 = pneg %p145
      // Predicated region
      $region9: #{tpu_custom_call.1} parent=5 // pred_check
        _
      $region10: #{tpu_custom_call.1} parent=5 // pred_check_branch
        %148 = sbr.rel (%p145) target = $region12
      $region11: #{tpu_custom_call.1} parent=5 // pred_region
        %s149 = ssub.s32 %s15, 1
        // Predicated region
        $region13: #{tpu_custom_call.1} parent=11 // pred_check
          %p150 = pneg %p36
        $region14: #{tpu_custom_call.1} parent=11 // pred_check_branch
          %152 = sbr.rel (%p150) target = $region16
        $region15: #{tpu_custom_call.1} parent=11 // pred_region
          %154 = vsyncadd [#allocation3], 0
          %s155 = sshll.u32 %s0, 4
          %s156 = int_to_ptr.hbm [resolvable:$true] %s155
          %s157 = sshll.u32 [#allocation2], 4
          %s158 = int_to_ptr.vmem [resolvable:$true] %s157
          %163 = dma.hbm_to_vmem [thread:$0]  %s156, 1280, %s158, [#allocation3], 128, 128, 8
        $region16: #{tpu_custom_call.1} parent=11 // pred_fallthru
          _
        // Predicated region
        $region17: #{tpu_custom_call.1} parent=11 // pred_check
          %p164 = pneg %p57
        $region18: #{tpu_custom_call.1} parent=11 // pred_check_branch
          %166 = sbr.rel (%p164) target = $region20
        $region19: #{tpu_custom_call.1} parent=11 // pred_region
          %168 = vsyncadd [#allocation6], 0
          %s169 = sshll.u32 %s1, 4
          %s170 = int_to_ptr.hbm [resolvable:$true] %s169
          %s171 = sshll.u32 [#allocation5], 4
          %s172 = int_to_ptr.vmem [resolvable:$true] %s171
          %177 = dma.hbm_to_vmem [thread:$0]  %s170, 1024, %s172, [#allocation6], 128, 128, 8
        $region20: #{tpu_custom_call.1} parent=11 // pred_fallthru
          _
      $region12: #{tpu_custom_call.1} parent=5 // pred_fallthru
        _
      %p178 = scmp.lt.s32.totalorder %s15, 2
      // Predicated region
      $region21: #{tpu_custom_call.1} parent=5 // pred_check
        %p179 = pneg %p178
      $region22: #{tpu_custom_call.1} parent=5 // pred_check_branch
        %181 = sbr.rel (%p179) target = $region24
      $region23: #{tpu_custom_call.1} parent=5 // pred_region
        // Predicated region
        $region25: #{tpu_custom_call.1} parent=23 // pred_check
          %p182 = pneg %p77
        $region26: #{tpu_custom_call.1} parent=23 // pred_check_branch
          %184 = sbr.rel (%p182) target = $region28
        $region27: #{tpu_custom_call.1} parent=23 // pred_region
          %s185 = sand.u32 %s15, 1
          %s186 = scalar_lea.sflag [#allocation3], %s185
          %s187 = sand.u32 %s67, 1
          %s188 = smul.addr %s187, 16
          %s189 = scalar_lea.vmem [#allocation7], %s188
          %191 = vsyncadd %s186, 0
          %s192 = smul.addr %s15, 2
          %s193 = smul.addr %s192, 8
          %s194 = scalar_lea.hbm %s2, %s193
          %s195 = sshll.u32 %s194, 4
          %s196 = int_to_ptr.hbm [resolvable:$true] %s195
          %s197 = sshll.u32 %s189, 4
          %s198 = int_to_ptr.vmem [resolvable:$true] %s197
          %203 = dma.hbm_to_vmem [thread:$0]  %s196, 256, %s198, %s186, 128, 128, 8
        $region28: #{tpu_custom_call.1} parent=23 // pred_fallthru
          _
        // Predicated region
        $region29: #{tpu_custom_call.1} parent=23 // pred_check
          %p204 = pneg %p103
        $region30: #{tpu_custom_call.1} parent=23 // pred_check_branch
          %206 = sbr.rel (%p204) target = $region32
        $region31: #{tpu_custom_call.1} parent=23 // pred_region
          %s207 = sand.u32 %s15, 1
          %s208 = scalar_lea.sflag [#allocation3], %s207
          %s209 = sand.u32 %s93, 1
          %s210 = smul.addr %s209, 16
          %s211 = scalar_lea.vmem [#allocation8], %s210
          %213 = vsyncadd %s208, 0
          %s214 = smul.addr %s15, 2
          %s215 = smul.addr %s214, 8
          %s216 = scalar_lea.hbm %s3, %s215
          %s217 = sshll.u32 %s216, 4
          %s218 = int_to_ptr.hbm [resolvable:$true] %s217
          %s219 = sshll.u32 %s211, 4
          %s220 = int_to_ptr.vmem [resolvable:$true] %s219
          %225 = dma.hbm_to_vmem [thread:$0]  %s218, 256, %s220, %s208, 128, 128, 8
        $region32: #{tpu_custom_call.1} parent=23 // pred_fallthru
          _
      $region24: #{tpu_custom_call.1} parent=5 // pred_fallthru
        _
      %p226 = scmp.le.s32.totalorder 1, %s15
      %p227 = scmp.lt.s32.totalorder %s15, 3
      %p228 = pnand %p226, %p227
      %p229 = pneg %p228
      // Predicated region
      $region33: #{tpu_custom_call.1} parent=5 // pred_check
        _
      $region34: #{tpu_custom_call.1} parent=5 // pred_check_branch
        %231 = sbr.rel (%p228) target = $region36
      $region35: #{tpu_custom_call.1} parent=5 // pred_region
        %s232 = ssub.s32 %s15, 1
        // Predicated region
        $region37: #{tpu_custom_call.1} parent=35 // pred_check
          %p233 = pneg %p36
        $region38: #{tpu_custom_call.1} parent=35 // pred_check_branch
          %235 = sbr.rel (%p233) target = $region40
        $region39: #{tpu_custom_call.1} parent=35 // pred_region
          %237 = dma.done [#allocation3], 1280
        $region40: #{tpu_custom_call.1} parent=35 // pred_fallthru
          _
        // Predicated region
        $region41: #{tpu_custom_call.1} parent=35 // pred_check
          %p238 = pneg %p57
        $region42: #{tpu_custom_call.1} parent=35 // pred_check_branch
          %240 = sbr.rel (%p238) target = $region44
        $region43: #{tpu_custom_call.1} parent=35 // pred_region
          %242 = dma.done [#allocation6], 1024
        $region44: #{tpu_custom_call.1} parent=35 // pred_fallthru
          _
        %s243 = sand.u32 %s20, 1
        %s244 = scalar_lea.sflag [#allocation3], %s243
        %s245 = sand.u32 %s70, 1
        %s246 = smul.addr %s245, 16
        %s247 = scalar_lea.vmem [#allocation7], %s246
        // Predicated region
        $region45: #{tpu_custom_call.1} parent=35 // pred_check
          %p248 = pneg %p83
        $region46: #{tpu_custom_call.1} parent=35 // pred_check_branch
          %250 = sbr.rel (%p248) target = $region48
        $region47: #{tpu_custom_call.1} parent=35 // pred_region
          %252 = dma.done %s244, 256
        $region48: #{tpu_custom_call.1} parent=35 // pred_fallthru
          _
        %s253 = sand.u32 %s20, 1
        %s254 = scalar_lea.sflag [#allocation3], %s253
        %s255 = sand.u32 %s96, 1
        %s256 = smul.addr %s255, 16
        %s257 = scalar_lea.vmem [#allocation8], %s256
        // Predicated region
        $region49: #{tpu_custom_call.1} parent=35 // pred_check
          %p258 = pneg %p109
        $region50: #{tpu_custom_call.1} parent=35 // pred_check_branch
          %260 = sbr.rel (%p258) target = $region52
        $region51: #{tpu_custom_call.1} parent=35 // pred_region
          %262 = dma.done %s254, 256
        $region52: #{tpu_custom_call.1} parent=35 // pred_fallthru
          _
        %p263 = pneg %p36
        %p264 = pneg %p33
        %p265 = pneg %p57
        %p266 = pneg %p54
        %s267 = sand.u32 %s20, 1
        %s268 = scalar_lea.sflag [#allocation3], %s267
        %s269 = sand.u32 %s70, 1
        %s270 = smul.addr %s269, 16
        %s271 = scalar_lea.vmem [#allocation7], %s270
        %p272 = pneg %p83
        %p273 = pneg %p80
        %s274 = sand.u32 %s20, 1
        %s275 = scalar_lea.sflag [#allocation3], %s274
        %s276 = sand.u32 %s96, 1
        %s277 = smul.addr %s276, 16
        %s278 = scalar_lea.vmem [#allocation8], %s277
        %p279 = pneg %p109
        %p280 = pneg %p106
        %p281 = pneg %p135
        %p282 = pneg %p132
        %s283 = sand.u32 %s122, 1
        %s284 = scalar_lea.sflag [#allocation4], %s283
        %s285 = sand.u32 %s122, 1
        %s286 = smul.addr %s285, 8
        %s287 = scalar_lea.vmem [#allocation9], %s286
        %v288 = vld [vmem:[%s247] sm:$0xff]
        %v289 = vld [vmem:[%s247 + $0x8] sm:$0xff]
        %v290 = vld [vmem:[%s257] sm:$0xff]
        %v291 = vld [vmem:[%s257 + $0x8] sm:$0xff]
        %v292 = vmul.f32 %v288, %v288
        %v293 = vmul.f32 %v289, %v289
        %v294 = vmul.f32 %v290, %v290
        %v295 = vmul.f32 %v291, %v291
        %v296 = vmul.f32 %v288, %v290
        %v297 = vmul.f32 %v289, %v291
        %v298 = vld [vmem:[#allocation2] sm:$0xff]
        %v299 = vld [vmem:[#allocation2 + $0x8] sm:$0xff]
        %v300 = vld [vmem:[#allocation2 + $0x10] sm:$0xff]
        %v301 = vld [vmem:[#allocation2 + $0x18] sm:$0xff]
        %v302 = vld [vmem:[#allocation2 + $0x20] sm:$0xff]
        %v303 = vld [vmem:[#allocation2 + $0x28] sm:$0xff]
        %v304 = vld [vmem:[#allocation2 + $0x30] sm:$0xff]
        %v305 = vld [vmem:[#allocation2 + $0x38] sm:$0xff]
        %v306 = vld [vmem:[#allocation2 + $0x40] sm:$0xff]
        %v307 = vld [vmem:[#allocation2 + $0x48] sm:$0xff]
        %vm308 = vcmask 654336
        %v310 = vsel %vm308, %v298, 0
        %v313 = vsel %vm308, %v299, 0
        %v316 = vsel %vm308, %v300, 0
        %v319 = vsel %vm308, %v301, 0
        %v322 = vsel %vm308, %v302, 0
        %v325 = vsel %vm308, %v303, 0
        %v328 = vsel %vm308, %v304, 0
        %v331 = vsel %vm308, %v305, 0
        %v334 = vsel %vm308, %v306, 0
        %v337 = vsel %vm308, %v307, 0
        %339 = vmatpush.msra.mxu0 0.0
        %340 = vmatpush.msra.mxu0 0.0
        %341 = vmatpush.msra.mxu0 0.0
        %342 = vmatpush.msra.mxu0 0.0
        %343 = vmatpush.msra.mxu0 0.0
        %344 = vmatpush.msra.mxu0 0.0
        %v345 = vand.u32 %v297, 4294901760
        %346 = vmatpush.msra.mxu0 %v345
        %v347 = vand.u32 %v296, 4294901760
        %348 = vmatpush.msra.mxu0 %v347
        %v349 = vand.u32 %v295, 4294901760
        %350 = vmatpush.msra.mxu0 %v349
        %v351 = vand.u32 %v294, 4294901760
        %352 = vmatpush.msra.mxu0 %v351
        %v353 = vand.u32 %v293, 4294901760
        %354 = vmatpush.msra.mxu0 %v353
        %v355 = vand.u32 %v292, 4294901760
        %356 = vmatpush.msra.mxu0 %v355
        %v357 = vand.u32 %v291, 4294901760
        %358 = vmatpush.msra.mxu0 %v357
        %v359 = vand.u32 %v290, 4294901760
        %360 = vmatpush.msra.mxu0 %v359
        %v361 = vand.u32 %v289, 4294901760
        %362 = vmatpush.msra.mxu0 %v361
        %v363 = vand.u32 %v288, 4294901760
        %364 = vmatpush.msra.mxu0 %v363
        %v365 = vand.u32 %v310, 4294901760
        %v366 = vsub.f32 %v310, %v365
        %v367 = vand.u32 %v366, 4294901760
        %v368 = vsub.f32 %v366, %v367
        %v369 = vand.u32 %v368, 4294901760
        %370 = vmatmul.f32.gmra.mxu0 %v369
        %v371 = vpop.f32.mrf.mxu0
        %v372 = vadd.f32 0.0, %v371
        %v373 = vand.u32 %v313, 4294901760
        %v374 = vsub.f32 %v313, %v373
        %v375 = vand.u32 %v374, 4294901760
        %v376 = vsub.f32 %v374, %v375
        %v377 = vand.u32 %v376, 4294901760
        %378 = vmatmul.f32.gmra.mxu0 %v377
        %v379 = vpop.f32.mrf.mxu0
        %v380 = vadd.f32 0.0, %v379
        %v381 = vand.u32 %v316, 4294901760
        %v382 = vsub.f32 %v316, %v381
        %v383 = vand.u32 %v382, 4294901760
        %v384 = vsub.f32 %v382, %v383
        %v385 = vand.u32 %v384, 4294901760
        %386 = vmatmul.f32.gmra.mxu0 %v385
        %v387 = vpop.f32.mrf.mxu0
        %v388 = vadd.f32 0.0, %v387
        %v389 = vand.u32 %v319, 4294901760
        %v390 = vsub.f32 %v319, %v389
        %v391 = vand.u32 %v390, 4294901760
        %v392 = vsub.f32 %v390, %v391
        %v393 = vand.u32 %v392, 4294901760
        %394 = vmatmul.f32.gmra.mxu0 %v393
        %v395 = vpop.f32.mrf.mxu0
        %v396 = vadd.f32 0.0, %v395
        %v397 = vand.u32 %v322, 4294901760
        %v398 = vsub.f32 %v322, %v397
        %v399 = vand.u32 %v398, 4294901760
        %v400 = vsub.f32 %v398, %v399
        %v401 = vand.u32 %v400, 4294901760
        %402 = vmatmul.f32.gmra.mxu0 %v401
        %v403 = vpop.f32.mrf.mxu0
        %v404 = vadd.f32 0.0, %v403
        %v405 = vand.u32 %v325, 4294901760
        %v406 = vsub.f32 %v325, %v405
        %v407 = vand.u32 %v406, 4294901760
        %v408 = vsub.f32 %v406, %v407
        %v409 = vand.u32 %v408, 4294901760
        %410 = vmatmul.f32.gmra.mxu0 %v409
        %v411 = vpop.f32.mrf.mxu0
        %v412 = vadd.f32 0.0, %v411
        %v413 = vand.u32 %v328, 4294901760
        %v414 = vsub.f32 %v328, %v413
        %v415 = vand.u32 %v414, 4294901760
        %v416 = vsub.f32 %v414, %v415
        %v417 = vand.u32 %v416, 4294901760
        %418 = vmatmul.f32.gmra.mxu0 %v417
        %v419 = vpop.f32.mrf.mxu0
        %v420 = vadd.f32 0.0, %v419
        %v421 = vand.u32 %v331, 4294901760
        %v422 = vsub.f32 %v331, %v421
        %v423 = vand.u32 %v422, 4294901760
        %v424 = vsub.f32 %v422, %v423
        %v425 = vand.u32 %v424, 4294901760
        %426 = vmatmul.f32.gmra.mxu0 %v425
        %v427 = vpop.f32.mrf.mxu0
        %v428 = vadd.f32 0.0, %v427
        %v429 = vand.u32 %v334, 4294901760
        %v430 = vsub.f32 %v334, %v429
        %v431 = vand.u32 %v430, 4294901760
        %v432 = vsub.f32 %v430, %v431
        %v433 = vand.u32 %v432, 4294901760
        %434 = vmatmul.f32.gmra.mxu0 %v433
        %v435 = vpop.f32.mrf.mxu0
        %v436 = vadd.f32 0.0, %v435
        %v437 = vand.u32 %v337, 4294901760
        %v438 = vsub.f32 %v337, %v437
        %v439 = vand.u32 %v438, 4294901760
        %v440 = vsub.f32 %v438, %v439
        %v441 = vand.u32 %v440, 4294901760
        %442 = vmatmul.f32.gmra.mxu0 %v441
        %v443 = vpop.f32.mrf.mxu0
        %v444 = vadd.f32 0.0, %v443
        %445 = vdwg.mxu0
        %446 = vmatpush.msra.mxu0 0.0
        %447 = vmatpush.msra.mxu0 0.0
        %448 = vmatpush.msra.mxu0 0.0
        %449 = vmatpush.msra.mxu0 0.0
        %450 = vmatpush.msra.mxu0 0.0
        %451 = vmatpush.msra.mxu0 0.0
        %v452 = vand.u32 %v297, 4294901760
        %v453 = vsub.f32 %v297, %v452
        %v454 = vand.u32 %v453, 4294901760
        %v455 = vsub.f32 %v453, %v454
        %v456 = vand.u32 %v455, 4294901760
        %457 = vmatpush.msra.mxu0 %v456
        %v458 = vand.u32 %v296, 4294901760
        %v459 = vsub.f32 %v296, %v458
        %v460 = vand.u32 %v459, 4294901760
        %v461 = vsub.f32 %v459, %v460
        %v462 = vand.u32 %v461, 4294901760
        %463 = vmatpush.msra.mxu0 %v462
        %v464 = vand.u32 %v295, 4294901760
        %v465 = vsub.f32 %v295, %v464
        %v466 = vand.u32 %v465, 4294901760
        %v467 = vsub.f32 %v465, %v466
        %v468 = vand.u32 %v467, 4294901760
        %469 = vmatpush.msra.mxu0 %v468
        %v470 = vand.u32 %v294, 4294901760
        %v471 = vsub.f32 %v294, %v470
        %v472 = vand.u32 %v471, 4294901760
        %v473 = vsub.f32 %v471, %v472
        %v474 = vand.u32 %v473, 4294901760
        %475 = vmatpush.msra.mxu0 %v474
        %v476 = vand.u32 %v293, 4294901760
        %v477 = vsub.f32 %v293, %v476
        %v478 = vand.u32 %v477, 4294901760
        %v479 = vsub.f32 %v477, %v478
        %v480 = vand.u32 %v479, 4294901760
        %481 = vmatpush.msra.mxu0 %v480
        %v482 = vand.u32 %v292, 4294901760
        %v483 = vsub.f32 %v292, %v482
        %v484 = vand.u32 %v483, 4294901760
        %v485 = vsub.f32 %v483, %v484
        %v486 = vand.u32 %v485, 4294901760
        %487 = vmatpush.msra.mxu0 %v486
        %v488 = vand.u32 %v291, 4294901760
        %v489 = vsub.f32 %v291, %v488
        %v490 = vand.u32 %v489, 4294901760
        %v491 = vsub.f32 %v489, %v490
        %v492 = vand.u32 %v491, 4294901760
        %493 = vmatpush.msra.mxu0 %v492
        %v494 = vand.u32 %v290, 4294901760
        %v495 = vsub.f32 %v290, %v494
        %v496 = vand.u32 %v495, 4294901760
        %v497 = vsub.f32 %v495, %v496
        %v498 = vand.u32 %v497, 4294901760
        %499 = vmatpush.msra.mxu0 %v498
        %v500 = vand.u32 %v289, 4294901760
        %v501 = vsub.f32 %v289, %v500
        %v502 = vand.u32 %v501, 4294901760
        %v503 = vsub.f32 %v501, %v502
        %v504 = vand.u32 %v503, 4294901760
        %505 = vmatpush.msra.mxu0 %v504
        %v506 = vand.u32 %v288, 4294901760
        %v507 = vsub.f32 %v288, %v506
        %v508 = vand.u32 %v507, 4294901760
        %v509 = vsub.f32 %v507, %v508
        %v510 = vand.u32 %v509, 4294901760
        %511 = vmatpush.msra.mxu0 %v510
        %v512 = vand.u32 %v310, 4294901760
        %513 = vmatmul.f32.gmra.mxu0 %v512
        %v514 = vpop.f32.mrf.mxu0
        %v515 = vadd.f32 %v372, %v514
        %v516 = vand.u32 %v313, 4294901760
        %517 = vmatmul.f32.gmra.mxu0 %v516
        %v518 = vpop.f32.mrf.mxu0
        %v519 = vadd.f32 %v380, %v518
        %v520 = vand.u32 %v316, 4294901760
        %521 = vmatmul.f32.gmra.mxu0 %v520
        %v522 = vpop.f32.mrf.mxu0
        %v523 = vadd.f32 %v388, %v522
        %v524 = vand.u32 %v319, 4294901760
        %525 = vmatmul.f32.gmra.mxu0 %v524
        %v526 = vpop.f32.mrf.mxu0
        %v527 = vadd.f32 %v396, %v526
        %v528 = vand.u32 %v322, 4294901760
        %529 = vmatmul.f32.gmra.mxu0 %v528
        %v530 = vpop.f32.mrf.mxu0
        %v531 = vadd.f32 %v404, %v530
        %v532 = vand.u32 %v325, 4294901760
        %533 = vmatmul.f32.gmra.mxu0 %v532
        %v534 = vpop.f32.mrf.mxu0
        %v535 = vadd.f32 %v412, %v534
        %v536 = vand.u32 %v328, 4294901760
        %537 = vmatmul.f32.gmra.mxu0 %v536
        %v538 = vpop.f32.mrf.mxu0
        %v539 = vadd.f32 %v420, %v538
        %v540 = vand.u32 %v331, 4294901760
        %541 = vmatmul.f32.gmra.mxu0 %v540
        %v542 = vpop.f32.mrf.mxu0
        %v543 = vadd.f32 %v428, %v542
        %v544 = vand.u32 %v334, 4294901760
        %545 = vmatmul.f32.gmra.mxu0 %v544
        %v546 = vpop.f32.mrf.mxu0
        %v547 = vadd.f32 %v436, %v546
        %v548 = vand.u32 %v337, 4294901760
        %549 = vmatmul.f32.gmra.mxu0 %v548
        %v550 = vpop.f32.mrf.mxu0
        %v551 = vadd.f32 %v444, %v550
        %552 = vdwg.mxu0
        %553 = vmatpush.msra.mxu0 0.0
        %554 = vmatpush.msra.mxu0 0.0
        %555 = vmatpush.msra.mxu0 0.0
        %556 = vmatpush.msra.mxu0 0.0
        %557 = vmatpush.msra.mxu0 0.0
        %558 = vmatpush.msra.mxu0 0.0
        %v559 = vand.u32 %v297, 4294901760
        %v560 = vsub.f32 %v297, %v559
        %561 = vmatpush.msra.mxu0 %v560
        %v562 = vand.u32 %v296, 4294901760
        %v563 = vsub.f32 %v296, %v562
        %564 = vmatpush.msra.mxu0 %v563
        %v565 = vand.u32 %v295, 4294901760
        %v566 = vsub.f32 %v295, %v565
        %567 = vmatpush.msra.mxu0 %v566
        %v568 = vand.u32 %v294, 4294901760
        %v569 = vsub.f32 %v294, %v568
        %570 = vmatpush.msra.mxu0 %v569
        %v571 = vand.u32 %v293, 4294901760
        %v572 = vsub.f32 %v293, %v571
        %573 = vmatpush.msra.mxu0 %v572
        %v574 = vand.u32 %v292, 4294901760
        %v575 = vsub.f32 %v292, %v574
        %576 = vmatpush.msra.mxu0 %v575
        %v577 = vand.u32 %v291, 4294901760
        %v578 = vsub.f32 %v291, %v577
        %579 = vmatpush.msra.mxu0 %v578
        %v580 = vand.u32 %v290, 4294901760
        %v581 = vsub.f32 %v290, %v580
        %582 = vmatpush.msra.mxu0 %v581
        %v583 = vand.u32 %v289, 4294901760
        %v584 = vsub.f32 %v289, %v583
        %585 = vmatpush.msra.mxu0 %v584
        %v586 = vand.u32 %v288, 4294901760
        %v587 = vsub.f32 %v288, %v586
        %588 = vmatpush.msra.mxu0 %v587
        %v589 = vand.u32 %v310, 4294901760
        %v590 = vsub.f32 %v310, %v589
        %591 = vmatmul.f32.gmra.mxu0 %v590
        %v592 = vpop.f32.mrf.mxu0
        %v593 = vadd.f32 %v515, %v592
        %v594 = vand.u32 %v313, 4294901760
        %v595 = vsub.f32 %v313, %v594
        %596 = vmatmul.f32.gmra.mxu0 %v595
        %v597 = vpop.f32.mrf.mxu0
        %v598 = vadd.f32 %v519, %v597
        %v599 = vand.u32 %v316, 4294901760
        %v600 = vsub.f32 %v316, %v599
        %601 = vmatmul.f32.gmra.mxu0 %v600
        %v602 = vpop.f32.mrf.mxu0
        %v603 = vadd.f32 %v523, %v602
        %v604 = vand.u32 %v319, 4294901760
        %v605 = vsub.f32 %v319, %v604
        %606 = vmatmul.f32.gmra.mxu0 %v605
        %v607 = vpop.f32.mrf.mxu0
        %v608 = vadd.f32 %v527, %v607
        %v609 = vand.u32 %v322, 4294901760
        %v610 = vsub.f32 %v322, %v609
        %611 = vmatmul.f32.gmra.mxu0 %v610
        %v612 = vpop.f32.mrf.mxu0
        %v613 = vadd.f32 %v531, %v612
        %v614 = vand.u32 %v325, 4294901760
        %v615 = vsub.f32 %v325, %v614
        %616 = vmatmul.f32.gmra.mxu0 %v615
        %v617 = vpop.f32.mrf.mxu0
        %v618 = vadd.f32 %v535, %v617
        %v619 = vand.u32 %v328, 4294901760
        %v620 = vsub.f32 %v328, %v619
        %621 = vmatmul.f32.gmra.mxu0 %v620
        %v622 = vpop.f32.mrf.mxu0
        %v623 = vadd.f32 %v539, %v622
        %v624 = vand.u32 %v331, 4294901760
        %v625 = vsub.f32 %v331, %v624
        %626 = vmatmul.f32.gmra.mxu0 %v625
        %v627 = vpop.f32.mrf.mxu0
        %v628 = vadd.f32 %v543, %v627
        %v629 = vand.u32 %v334, 4294901760
        %v630 = vsub.f32 %v334, %v629
        %631 = vmatmul.f32.gmra.mxu0 %v630
        %v632 = vpop.f32.mrf.mxu0
        %v633 = vadd.f32 %v547, %v632
        %v634 = vand.u32 %v337, 4294901760
        %v635 = vsub.f32 %v337, %v634
        %636 = vmatmul.f32.gmra.mxu0 %v635
        %v637 = vpop.f32.mrf.mxu0
        %v638 = vadd.f32 %v551, %v637
        %639 = vdwg.mxu0
        %640 = vmatpush.msra.mxu0 0.0
        %641 = vmatpush.msra.mxu0 0.0
        %642 = vmatpush.msra.mxu0 0.0
        %643 = vmatpush.msra.mxu0 0.0
        %644 = vmatpush.msra.mxu0 0.0
        %645 = vmatpush.msra.mxu0 0.0
        %v646 = vand.u32 %v297, 4294901760
        %647 = vmatpush.msra.mxu0 %v646
        %v648 = vand.u32 %v296, 4294901760
        %649 = vmatpush.msra.mxu0 %v648
        %v650 = vand.u32 %v295, 4294901760
        %651 = vmatpush.msra.mxu0 %v650
        %v652 = vand.u32 %v294, 4294901760
        %653 = vmatpush.msra.mxu0 %v652
        %v654 = vand.u32 %v293, 4294901760
        %655 = vmatpush.msra.mxu0 %v654
        %v656 = vand.u32 %v292, 4294901760
        %657 = vmatpush.msra.mxu0 %v656
        %v658 = vand.u32 %v291, 4294901760
        %659 = vmatpush.msra.mxu0 %v658
        %v660 = vand.u32 %v290, 4294901760
        %661 = vmatpush.msra.mxu0 %v660
        %v662 = vand.u32 %v289, 4294901760
        %663 = vmatpush.msra.mxu0 %v662
        %v664 = vand.u32 %v288, 4294901760
        %665 = vmatpush.msra.mxu0 %v664
        %v666 = vand.u32 %v310, 4294901760
        %v667 = vsub.f32 %v310, %v666
        %v668 = vand.u32 %v667, 4294901760
        %669 = vmatmul.f32.gmra.mxu0 %v668
        %v670 = vpop.f32.mrf.mxu0
        %v671 = vadd.f32 %v593, %v670
        %v672 = vand.u32 %v313, 4294901760
        %v673 = vsub.f32 %v313, %v672
        %v674 = vand.u32 %v673, 4294901760
        %675 = vmatmul.f32.gmra.mxu0 %v674
        %v676 = vpop.f32.mrf.mxu0
        %v677 = vadd.f32 %v598, %v676
        %v678 = vand.u32 %v316, 4294901760
        %v679 = vsub.f32 %v316, %v678
        %v680 = vand.u32 %v679, 4294901760
        %681 = vmatmul.f32.gmra.mxu0 %v680
        %v682 = vpop.f32.mrf.mxu0
        %v683 = vadd.f32 %v603, %v682
        %v684 = vand.u32 %v319, 4294901760
        %v685 = vsub.f32 %v319, %v684
        %v686 = vand.u32 %v685, 4294901760
        %687 = vmatmul.f32.gmra.mxu0 %v686
        %v688 = vpop.f32.mrf.mxu0
        %v689 = vadd.f32 %v608, %v688
        %v690 = vand.u32 %v322, 4294901760
        %v691 = vsub.f32 %v322, %v690
        %v692 = vand.u32 %v691, 4294901760
        %693 = vmatmul.f32.gmra.mxu0 %v692
        %v694 = vpop.f32.mrf.mxu0
        %v695 = vadd.f32 %v613, %v694
        %v696 = vand.u32 %v325, 4294901760
        %v697 = vsub.f32 %v325, %v696
        %v698 = vand.u32 %v697, 4294901760
        %699 = vmatmul.f32.gmra.mxu0 %v698
        %v700 = vpop.f32.mrf.mxu0
        %v701 = vadd.f32 %v618, %v700
        %v702 = vand.u32 %v328, 4294901760
        %v703 = vsub.f32 %v328, %v702
        %v704 = vand.u32 %v703, 4294901760
        %705 = vmatmul.f32.gmra.mxu0 %v704
        %v706 = vpop.f32.mrf.mxu0
        %v707 = vadd.f32 %v623, %v706
        %v708 = vand.u32 %v331, 4294901760
        %v709 = vsub.f32 %v331, %v708
        %v710 = vand.u32 %v709, 4294901760
        %711 = vmatmul.f32.gmra.mxu0 %v710
        %v712 = vpop.f32.mrf.mxu0
        %v713 = vadd.f32 %v628, %v712
        %v714 = vand.u32 %v334, 4294901760
        %v715 = vsub.f32 %v334, %v714
        %v716 = vand.u32 %v715, 4294901760
        %717 = vmatmul.f32.gmra.mxu0 %v716
        %v718 = vpop.f32.mrf.mxu0
        %v719 = vadd.f32 %v633, %v718
        %v720 = vand.u32 %v337, 4294901760
        %v721 = vsub.f32 %v337, %v720
        %v722 = vand.u32 %v721, 4294901760
        %723 = vmatmul.f32.gmra.mxu0 %v722
        %v724 = vpop.f32.mrf.mxu0
        %v725 = vadd.f32 %v638, %v724
        %726 = vdwg.mxu0
        %727 = vmatpush.msra.mxu0 0.0
        %728 = vmatpush.msra.mxu0 0.0
        %729 = vmatpush.msra.mxu0 0.0
        %730 = vmatpush.msra.mxu0 0.0
        %731 = vmatpush.msra.mxu0 0.0
        %732 = vmatpush.msra.mxu0 0.0
        %v733 = vand.u32 %v297, 4294901760
        %v734 = vsub.f32 %v297, %v733
        %v735 = vand.u32 %v734, 4294901760
        %736 = vmatpush.msra.mxu0 %v735
        %v737 = vand.u32 %v296, 4294901760
        %v738 = vsub.f32 %v296, %v737
        %v739 = vand.u32 %v738, 4294901760
        %740 = vmatpush.msra.mxu0 %v739
        %v741 = vand.u32 %v295, 4294901760
        %v742 = vsub.f32 %v295, %v741
        %v743 = vand.u32 %v742, 4294901760
        %744 = vmatpush.msra.mxu0 %v743
        %v745 = vand.u32 %v294, 4294901760
        %v746 = vsub.f32 %v294, %v745
        %v747 = vand.u32 %v746, 4294901760
        %748 = vmatpush.msra.mxu0 %v747
        %v749 = vand.u32 %v293, 4294901760
        %v750 = vsub.f32 %v293, %v749
        %v751 = vand.u32 %v750, 4294901760
        %752 = vmatpush.msra.mxu0 %v751
        %v753 = vand.u32 %v292, 4294901760
        %v754 = vsub.f32 %v292, %v753
        %v755 = vand.u32 %v754, 4294901760
        %756 = vmatpush.msra.mxu0 %v755
        %v757 = vand.u32 %v291, 4294901760
        %v758 = vsub.f32 %v291, %v757
        %v759 = vand.u32 %v758, 4294901760
        %760 = vmatpush.msra.mxu0 %v759
        %v761 = vand.u32 %v290, 4294901760
        %v762 = vsub.f32 %v290, %v761
        %v763 = vand.u32 %v762, 4294901760
        %764 = vmatpush.msra.mxu0 %v763
        %v765 = vand.u32 %v289, 4294901760
        %v766 = vsub.f32 %v289, %v765
        %v767 = vand.u32 %v766, 4294901760
        %768 = vmatpush.msra.mxu0 %v767
        %v769 = vand.u32 %v288, 4294901760
        %v770 = vsub.f32 %v288, %v769
        %v771 = vand.u32 %v770, 4294901760
        %772 = vmatpush.msra.mxu0 %v771
        %v773 = vand.u32 %v310, 4294901760
        %774 = vmatmul.f32.gmra.mxu0 %v773
        %v775 = vpop.f32.mrf.mxu0
        %v776 = vadd.f32 %v671, %v775
        %v777 = vand.u32 %v313, 4294901760
        %778 = vmatmul.f32.gmra.mxu0 %v777
        %v779 = vpop.f32.mrf.mxu0
        %v780 = vadd.f32 %v677, %v779
        %v781 = vand.u32 %v316, 4294901760
        %782 = vmatmul.f32.gmra.mxu0 %v781
        %v783 = vpop.f32.mrf.mxu0
        %v784 = vadd.f32 %v683, %v783
        %v785 = vand.u32 %v319, 4294901760
        %786 = vmatmul.f32.gmra.mxu0 %v785
        %v787 = vpop.f32.mrf.mxu0
        %v788 = vadd.f32 %v689, %v787
        %v789 = vand.u32 %v322, 4294901760
        %790 = vmatmul.f32.gmra.mxu0 %v789
        %v791 = vpop.f32.mrf.mxu0
        %v792 = vadd.f32 %v695, %v791
        %v793 = vand.u32 %v325, 4294901760
        %794 = vmatmul.f32.gmra.mxu0 %v793
        %v795 = vpop.f32.mrf.mxu0
        %v796 = vadd.f32 %v701, %v795
        %v797 = vand.u32 %v328, 4294901760
        %798 = vmatmul.f32.gmra.mxu0 %v797
        %v799 = vpop.f32.mrf.mxu0
        %v800 = vadd.f32 %v707, %v799
        %v801 = vand.u32 %v331, 4294901760
        %802 = vmatmul.f32.gmra.mxu0 %v801
        %v803 = vpop.f32.mrf.mxu0
        %v804 = vadd.f32 %v713, %v803
        %v805 = vand.u32 %v334, 4294901760
        %806 = vmatmul.f32.gmra.mxu0 %v805
        %v807 = vpop.f32.mrf.mxu0
        %v808 = vadd.f32 %v719, %v807
        %v809 = vand.u32 %v337, 4294901760
        %810 = vmatmul.f32.gmra.mxu0 %v809
        %v811 = vpop.f32.mrf.mxu0
        %v812 = vadd.f32 %v725, %v811
        %813 = vdwg.mxu0
        %814 = vmatpush.msra.mxu0 0.0
        %815 = vmatpush.msra.mxu0 0.0
        %816 = vmatpush.msra.mxu0 0.0
        %817 = vmatpush.msra.mxu0 0.0
        %818 = vmatpush.msra.mxu0 0.0
        %819 = vmatpush.msra.mxu0 0.0
        %v820 = vand.u32 %v297, 4294901760
        %821 = vmatpush.msra.mxu0 %v820
        %v822 = vand.u32 %v296, 4294901760
        %823 = vmatpush.msra.mxu0 %v822
        %v824 = vand.u32 %v295, 4294901760
        %825 = vmatpush.msra.mxu0 %v824
        %v826 = vand.u32 %v294, 4294901760
        %827 = vmatpush.msra.mxu0 %v826
        %v828 = vand.u32 %v293, 4294901760
        %829 = vmatpush.msra.mxu0 %v828
        %v830 = vand.u32 %v292, 4294901760
        %831 = vmatpush.msra.mxu0 %v830
        %v832 = vand.u32 %v291, 4294901760
        %833 = vmatpush.msra.mxu0 %v832
        %v834 = vand.u32 %v290, 4294901760
        %835 = vmatpush.msra.mxu0 %v834
        %v836 = vand.u32 %v289, 4294901760
        %837 = vmatpush.msra.mxu0 %v836
        %v838 = vand.u32 %v288, 4294901760
        %839 = vmatpush.msra.mxu0 %v838
        %v840 = vand.u32 %v310, 4294901760
        %841 = vmatmul.f32.gmra.mxu0 %v840
        %v842 = vpop.f32.mrf.mxu0
        %v843 = vadd.f32 %v776, %v842
        %v844 = vand.u32 %v313, 4294901760
        %845 = vmatmul.f32.gmra.mxu0 %v844
        %v846 = vpop.f32.mrf.mxu0
        %v847 = vadd.f32 %v780, %v846
        %v848 = vand.u32 %v316, 4294901760
        %849 = vmatmul.f32.gmra.mxu0 %v848
        %v850 = vpop.f32.mrf.mxu0
        %v851 = vadd.f32 %v784, %v850
        %v852 = vand.u32 %v319, 4294901760
        %853 = vmatmul.f32.gmra.mxu0 %v852
        %v854 = vpop.f32.mrf.mxu0
        %v855 = vadd.f32 %v788, %v854
        %v856 = vand.u32 %v322, 4294901760
        %857 = vmatmul.f32.gmra.mxu0 %v856
        %v858 = vpop.f32.mrf.mxu0
        %v859 = vadd.f32 %v792, %v858
        %v860 = vand.u32 %v325, 4294901760
        %861 = vmatmul.f32.gmra.mxu0 %v860
        %v862 = vpop.f32.mrf.mxu0
        %v863 = vadd.f32 %v796, %v862
        %v864 = vand.u32 %v328, 4294901760
        %865 = vmatmul.f32.gmra.mxu0 %v864
        %v866 = vpop.f32.mrf.mxu0
        %v867 = vadd.f32 %v800, %v866
        %v868 = vand.u32 %v331, 4294901760
        %869 = vmatmul.f32.gmra.mxu0 %v868
        %v870 = vpop.f32.mrf.mxu0
        %v871 = vadd.f32 %v804, %v870
        %v872 = vand.u32 %v334, 4294901760
        %873 = vmatmul.f32.gmra.mxu0 %v872
        %v874 = vpop.f32.mrf.mxu0
        %v875 = vadd.f32 %v808, %v874
        %v876 = vand.u32 %v337, 4294901760
        %877 = vmatmul.f32.gmra.mxu0 %v876
        %v878 = vpop.f32.mrf.mxu0
        %v879 = vadd.f32 %v812, %v878
        %880 = vdwg.mxu0
        %v881 = vld [vmem:[#allocation5] sm:$0xff]
        %v882 = vld [vmem:[#allocation5 + $0x8] sm:$0xff]
        %v883 = vld [vmem:[#allocation5 + $0x10] sm:$0xff]
        %v884 = vld [vmem:[#allocation5 + $0x18] sm:$0xff]
        %v885 = vld [vmem:[#allocation5 + $0x20] sm:$0xff]
        %v886 = vld [vmem:[#allocation5 + $0x28] sm:$0xff]
        %v887 = vld [vmem:[#allocation5 + $0x30] sm:$0xff]
        %v888 = vld [vmem:[#allocation5 + $0x38] sm:$0xff]
        %vm889 = vcmask 523264
        %v891 = vsel %vm889, %v843, 0
        %v894 = vsel %vm889, %v847, 0
        %v897 = vsel %vm889, %v851, 0
        %v900 = vsel %vm889, %v855, 0
        %v903 = vsel %vm889, %v859, 0
        %v906 = vsel %vm889, %v863, 0
        %v909 = vsel %vm889, %v867, 0
        %v912 = vsel %vm889, %v871, 0
        %v915 = vsel %vm889, %v875, 0
        %v918 = vsel %vm889, %v879, 0
        %920 = vmatpush.msra.mxu0 0.0
        %921 = vmatpush.msra.mxu0 0.0
        %922 = vmatpush.msra.mxu0 0.0
        %923 = vmatpush.msra.mxu0 0.0
        %924 = vmatpush.msra.mxu0 0.0
        %925 = vmatpush.msra.mxu0 0.0
        %926 = vmatpush.msra.mxu0 0.0
        %927 = vmatpush.msra.mxu0 0.0
        %v928 = vand.u32 %v888, 4294901760
        %929 = vmatpush.msra.mxu0 %v928
        %v930 = vand.u32 %v887, 4294901760
        %931 = vmatpush.msra.mxu0 %v930
        %v932 = vand.u32 %v886, 4294901760
        %933 = vmatpush.msra.mxu0 %v932
        %v934 = vand.u32 %v885, 4294901760
        %935 = vmatpush.msra.mxu0 %v934
        %v936 = vand.u32 %v884, 4294901760
        %937 = vmatpush.msra.mxu0 %v936
        %v938 = vand.u32 %v883, 4294901760
        %939 = vmatpush.msra.mxu0 %v938
        %v940 = vand.u32 %v882, 4294901760
        %941 = vmatpush.msra.mxu0 %v940
        %v942 = vand.u32 %v881, 4294901760
        %943 = vmatpush.msra.mxu0 %v942
        %v944 = vand.u32 %v891, 4294901760
        %v945 = vsub.f32 %v891, %v944
        %v946 = vand.u32 %v945, 4294901760
        %v947 = vsub.f32 %v945, %v946
        %v948 = vand.u32 %v947, 4294901760
        %949 = vmatmul.f32.gmra.mxu0 %v948
        %v950 = vpop.f32.mrf.mxu0
        %v951 = vadd.f32 0.0, %v950
        %v952 = vand.u32 %v894, 4294901760
        %v953 = vsub.f32 %v894, %v952
        %v954 = vand.u32 %v953, 4294901760
        %v955 = vsub.f32 %v953, %v954
        %v956 = vand.u32 %v955, 4294901760
        %957 = vmatmul.f32.gmra.mxu0 %v956
        %v958 = vpop.f32.mrf.mxu0
        %v959 = vadd.f32 0.0, %v958
        %v960 = vand.u32 %v897, 4294901760
        %v961 = vsub.f32 %v897, %v960
        %v962 = vand.u32 %v961, 4294901760
        %v963 = vsub.f32 %v961, %v962
        %v964 = vand.u32 %v963, 4294901760
        %965 = vmatmul.f32.gmra.mxu0 %v964
        %v966 = vpop.f32.mrf.mxu0
        %v967 = vadd.f32 0.0, %v966
        %v968 = vand.u32 %v900, 4294901760
        %v969 = vsub.f32 %v900, %v968
        %v970 = vand.u32 %v969, 4294901760
        %v971 = vsub.f32 %v969, %v970
        %v972 = vand.u32 %v971, 4294901760
        %973 = vmatmul.f32.gmra.mxu0 %v972
        %v974 = vpop.f32.mrf.mxu0
        %v975 = vadd.f32 0.0, %v974
        %v976 = vand.u32 %v903, 4294901760
        %v977 = vsub.f32 %v903, %v976
        %v978 = vand.u32 %v977, 4294901760
        %v979 = vsub.f32 %v977, %v978
        %v980 = vand.u32 %v979, 4294901760
        %981 = vmatmul.f32.gmra.mxu0 %v980
        %v982 = vpop.f32.mrf.mxu0
        %v983 = vadd.f32 0.0, %v982
        %v984 = vand.u32 %v906, 4294901760
        %v985 = vsub.f32 %v906, %v984
        %v986 = vand.u32 %v985, 4294901760
        %v987 = vsub.f32 %v985, %v986
        %v988 = vand.u32 %v987, 4294901760
        %989 = vmatmul.f32.gmra.mxu0 %v988
        %v990 = vpop.f32.mrf.mxu0
        %v991 = vadd.f32 0.0, %v990
        %v992 = vand.u32 %v909, 4294901760
        %v993 = vsub.f32 %v909, %v992
        %v994 = vand.u32 %v993, 4294901760
        %v995 = vsub.f32 %v993, %v994
        %v996 = vand.u32 %v995, 4294901760
        %997 = vmatmul.f32.gmra.mxu0 %v996
        %v998 = vpop.f32.mrf.mxu0
        %v999 = vadd.f32 0.0, %v998
        %v1000 = vand.u32 %v912, 4294901760
        %v1001 = vsub.f32 %v912, %v1000
        %v1002 = vand.u32 %v1001, 4294901760
        %v1003 = vsub.f32 %v1001, %v1002
        %v1004 = vand.u32 %v1003, 4294901760
        %1005 = vmatmul.f32.gmra.mxu0 %v1004
        %v1006 = vpop.f32.mrf.mxu0
        %v1007 = vadd.f32 0.0, %v1006
        %v1008 = vand.u32 %v915, 4294901760
        %v1009 = vsub.f32 %v915, %v1008
        %v1010 = vand.u32 %v1009, 4294901760
        %v1011 = vsub.f32 %v1009, %v1010
        %v1012 = vand.u32 %v1011, 4294901760
        %1013 = vmatmul.f32.gmra.mxu0 %v1012
        %v1014 = vpop.f32.mrf.mxu0
        %v1015 = vadd.f32 0.0, %v1014
        %v1016 = vand.u32 %v918, 4294901760
        %v1017 = vsub.f32 %v918, %v1016
        %v1018 = vand.u32 %v1017, 4294901760
        %v1019 = vsub.f32 %v1017, %v1018
        %v1020 = vand.u32 %v1019, 4294901760
        %1021 = vmatmul.f32.gmra.mxu0 %v1020
        %v1022 = vpop.f32.mrf.mxu0
        %v1023 = vadd.f32 0.0, %v1022
        %1024 = vdwg.mxu0
        %1025 = vmatpush.msra.mxu0 0.0
        %1026 = vmatpush.msra.mxu0 0.0
        %1027 = vmatpush.msra.mxu0 0.0
        %1028 = vmatpush.msra.mxu0 0.0
        %1029 = vmatpush.msra.mxu0 0.0
        %1030 = vmatpush.msra.mxu0 0.0
        %1031 = vmatpush.msra.mxu0 0.0
        %1032 = vmatpush.msra.mxu0 0.0
        %v1033 = vand.u32 %v888, 4294901760
        %v1034 = vsub.f32 %v888, %v1033
        %v1035 = vand.u32 %v1034, 4294901760
        %v1036 = vsub.f32 %v1034, %v1035
        %v1037 = vand.u32 %v1036, 4294901760
        %1038 = vmatpush.msra.mxu0 %v1037
        %v1039 = vand.u32 %v887, 4294901760
        %v1040 = vsub.f32 %v887, %v1039
        %v1041 = vand.u32 %v1040, 4294901760
        %v1042 = vsub.f32 %v1040, %v1041
        %v1043 = vand.u32 %v1042, 4294901760
        %1044 = vmatpush.msra.mxu0 %v1043
        %v1045 = vand.u32 %v886, 4294901760
        %v1046 = vsub.f32 %v886, %v1045
        %v1047 = vand.u32 %v1046, 4294901760
        %v1048 = vsub.f32 %v1046, %v1047
        %v1049 = vand.u32 %v1048, 4294901760
        %1050 = vmatpush.msra.mxu0 %v1049
        %v1051 = vand.u32 %v885, 4294901760
        %v1052 = vsub.f32 %v885, %v1051
        %v1053 = vand.u32 %v1052, 4294901760
        %v1054 = vsub.f32 %v1052, %v1053
        %v1055 = vand.u32 %v1054, 4294901760
        %1056 = vmatpush.msra.mxu0 %v1055
        %v1057 = vand.u32 %v884, 4294901760
        %v1058 = vsub.f32 %v884, %v1057
        %v1059 = vand.u32 %v1058, 4294901760
        %v1060 = vsub.f32 %v1058, %v1059
        %v1061 = vand.u32 %v1060, 4294901760
        %1062 = vmatpush.msra.mxu0 %v1061
        %v1063 = vand.u32 %v883, 4294901760
        %v1064 = vsub.f32 %v883, %v1063
        %v1065 = vand.u32 %v1064, 4294901760
        %v1066 = vsub.f32 %v1064, %v1065
        %v1067 = vand.u32 %v1066, 4294901760
        %1068 = vmatpush.msra.mxu0 %v1067
        %v1069 = vand.u32 %v882, 4294901760
        %v1070 = vsub.f32 %v882, %v1069
        %v1071 = vand.u32 %v1070, 4294901760
        %v1072 = vsub.f32 %v1070, %v1071
        %v1073 = vand.u32 %v1072, 4294901760
        %1074 = vmatpush.msra.mxu0 %v1073
        %v1075 = vand.u32 %v881, 4294901760
        %v1076 = vsub.f32 %v881, %v1075
        %v1077 = vand.u32 %v1076, 4294901760
        %v1078 = vsub.f32 %v1076, %v1077
        %v1079 = vand.u32 %v1078, 4294901760
        %1080 = vmatpush.msra.mxu0 %v1079
        %v1081 = vand.u32 %v891, 4294901760
        %1082 = vmatmul.f32.gmra.mxu0 %v1081
        %v1083 = vpop.f32.mrf.mxu0
        %v1084 = vadd.f32 %v951, %v1083
        %v1085 = vand.u32 %v894, 4294901760
        %1086 = vmatmul.f32.gmra.mxu0 %v1085
        %v1087 = vpop.f32.mrf.mxu0
        %v1088 = vadd.f32 %v959, %v1087
        %v1089 = vand.u32 %v897, 4294901760
        %1090 = vmatmul.f32.gmra.mxu0 %v1089
        %v1091 = vpop.f32.mrf.mxu0
        %v1092 = vadd.f32 %v967, %v1091
        %v1093 = vand.u32 %v900, 4294901760
        %1094 = vmatmul.f32.gmra.mxu0 %v1093
        %v1095 = vpop.f32.mrf.mxu0
        %v1096 = vadd.f32 %v975, %v1095
        %v1097 = vand.u32 %v903, 4294901760
        %1098 = vmatmul.f32.gmra.mxu0 %v1097
        %v1099 = vpop.f32.mrf.mxu0
        %v1100 = vadd.f32 %v983, %v1099
        %v1101 = vand.u32 %v906, 4294901760
        %1102 = vmatmul.f32.gmra.mxu0 %v1101
        %v1103 = vpop.f32.mrf.mxu0
        %v1104 = vadd.f32 %v991, %v1103
        %v1105 = vand.u32 %v909, 4294901760
        %1106 = vmatmul.f32.gmra.mxu0 %v1105
        %v1107 = vpop.f32.mrf.mxu0
        %v1108 = vadd.f32 %v999, %v1107
        %v1109 = vand.u32 %v912, 4294901760
        %1110 = vmatmul.f32.gmra.mxu0 %v1109
        %v1111 = vpop.f32.mrf.mxu0
        %v1112 = vadd.f32 %v1007, %v1111
        %v1113 = vand.u32 %v915, 4294901760
        %1114 = vmatmul.f32.gmra.mxu0 %v1113
        %v1115 = vpop.f32.mrf.mxu0
        %v1116 = vadd.f32 %v1015, %v1115
        %v1117 = vand.u32 %v918, 4294901760
        %1118 = vmatmul.f32.gmra.mxu0 %v1117
        %v1119 = vpop.f32.mrf.mxu0
        %v1120 = vadd.f32 %v1023, %v1119
        %1121 = vdwg.mxu0
        %1122 = vmatpush.msra.mxu0 0.0
        %1123 = vmatpush.msra.mxu0 0.0
        %1124 = vmatpush.msra.mxu0 0.0
        %1125 = vmatpush.msra.mxu0 0.0
        %1126 = vmatpush.msra.mxu0 0.0
        %1127 = vmatpush.msra.mxu0 0.0
        %1128 = vmatpush.msra.mxu0 0.0
        %1129 = vmatpush.msra.mxu0 0.0
        %v1130 = vand.u32 %v888, 4294901760
        %v1131 = vsub.f32 %v888, %v1130
        %1132 = vmatpush.msra.mxu0 %v1131
        %v1133 = vand.u32 %v887, 4294901760
        %v1134 = vsub.f32 %v887, %v1133
        %1135 = vmatpush.msra.mxu0 %v1134
        %v1136 = vand.u32 %v886, 4294901760
        %v1137 = vsub.f32 %v886, %v1136
        %1138 = vmatpush.msra.mxu0 %v1137
        %v1139 = vand.u32 %v885, 4294901760
        %v1140 = vsub.f32 %v885, %v1139
        %1141 = vmatpush.msra.mxu0 %v1140
        %v1142 = vand.u32 %v884, 4294901760
        %v1143 = vsub.f32 %v884, %v1142
        %1144 = vmatpush.msra.mxu0 %v1143
        %v1145 = vand.u32 %v883, 4294901760
        %v1146 = vsub.f32 %v883, %v1145
        %1147 = vmatpush.msra.mxu0 %v1146
        %v1148 = vand.u32 %v882, 4294901760
        %v1149 = vsub.f32 %v882, %v1148
        %1150 = vmatpush.msra.mxu0 %v1149
        %v1151 = vand.u32 %v881, 4294901760
        %v1152 = vsub.f32 %v881, %v1151
        %1153 = vmatpush.msra.mxu0 %v1152
        %v1154 = vand.u32 %v891, 4294901760
        %v1155 = vsub.f32 %v891, %v1154
        %1156 = vmatmul.f32.gmra.mxu0 %v1155
        %v1157 = vpop.f32.mrf.mxu0
        %v1158 = vadd.f32 %v1084, %v1157
        %v1159 = vand.u32 %v894, 4294901760
        %v1160 = vsub.f32 %v894, %v1159
        %1161 = vmatmul.f32.gmra.mxu0 %v1160
        %v1162 = vpop.f32.mrf.mxu0
        %v1163 = vadd.f32 %v1088, %v1162
        %v1164 = vand.u32 %v897, 4294901760
        %v1165 = vsub.f32 %v897, %v1164
        %1166 = vmatmul.f32.gmra.mxu0 %v1165
        %v1167 = vpop.f32.mrf.mxu0
        %v1168 = vadd.f32 %v1092, %v1167
        %v1169 = vand.u32 %v900, 4294901760
        %v1170 = vsub.f32 %v900, %v1169
        %1171 = vmatmul.f32.gmra.mxu0 %v1170
        %v1172 = vpop.f32.mrf.mxu0
        %v1173 = vadd.f32 %v1096, %v1172
        %v1174 = vand.u32 %v903, 4294901760
        %v1175 = vsub.f32 %v903, %v1174
        %1176 = vmatmul.f32.gmra.mxu0 %v1175
        %v1177 = vpop.f32.mrf.mxu0
        %v1178 = vadd.f32 %v1100, %v1177
        %v1179 = vand.u32 %v906, 4294901760
        %v1180 = vsub.f32 %v906, %v1179
        %1181 = vmatmul.f32.gmra.mxu0 %v1180
        %v1182 = vpop.f32.mrf.mxu0
        %v1183 = vadd.f32 %v1104, %v1182
        %v1184 = vand.u32 %v909, 4294901760
        %v1185 = vsub.f32 %v909, %v1184
        %1186 = vmatmul.f32.gmra.mxu0 %v1185
        %v1187 = vpop.f32.mrf.mxu0
        %v1188 = vadd.f32 %v1108, %v1187
        %v1189 = vand.u32 %v912, 4294901760
        %v1190 = vsub.f32 %v912, %v1189
        %1191 = vmatmul.f32.gmra.mxu0 %v1190
        %v1192 = vpop.f32.mrf.mxu0
        %v1193 = vadd.f32 %v1112, %v1192
        %v1194 = vand.u32 %v915, 4294901760
        %v1195 = vsub.f32 %v915, %v1194
        %1196 = vmatmul.f32.gmra.mxu0 %v1195
        %v1197 = vpop.f32.mrf.mxu0
        %v1198 = vadd.f32 %v1116, %v1197
        %v1199 = vand.u32 %v918, 4294901760
        %v1200 = vsub.f32 %v918, %v1199
        %1201 = vmatmul.f32.gmra.mxu0 %v1200
        %v1202 = vpop.f32.mrf.mxu0
        %v1203 = vadd.f32 %v1120, %v1202
        %1204 = vdwg.mxu0
        %1205 = vmatpush.msra.mxu0 0.0
        %1206 = vmatpush.msra.mxu0 0.0
        %1207 = vmatpush.msra.mxu0 0.0
        %1208 = vmatpush.msra.mxu0 0.0
        %1209 = vmatpush.msra.mxu0 0.0
        %1210 = vmatpush.msra.mxu0 0.0
        %1211 = vmatpush.msra.mxu0 0.0
        %1212 = vmatpush.msra.mxu0 0.0
        %v1213 = vand.u32 %v888, 4294901760
        %1214 = vmatpush.msra.mxu0 %v1213
        %v1215 = vand.u32 %v887, 4294901760
        %1216 = vmatpush.msra.mxu0 %v1215
        %v1217 = vand.u32 %v886, 4294901760
        %1218 = vmatpush.msra.mxu0 %v1217
        %v1219 = vand.u32 %v885, 4294901760
        %1220 = vmatpush.msra.mxu0 %v1219
        %v1221 = vand.u32 %v884, 4294901760
        %1222 = vmatpush.msra.mxu0 %v1221
        %v1223 = vand.u32 %v883, 4294901760
        %1224 = vmatpush.msra.mxu0 %v1223
        %v1225 = vand.u32 %v882, 4294901760
        %1226 = vmatpush.msra.mxu0 %v1225
        %v1227 = vand.u32 %v881, 4294901760
        %1228 = vmatpush.msra.mxu0 %v1227
        %v1229 = vand.u32 %v891, 4294901760
        %v1230 = vsub.f32 %v891, %v1229
        %v1231 = vand.u32 %v1230, 4294901760
        %1232 = vmatmul.f32.gmra.mxu0 %v1231
        %v1233 = vpop.f32.mrf.mxu0
        %v1234 = vadd.f32 %v1158, %v1233
        %v1235 = vand.u32 %v894, 4294901760
        %v1236 = vsub.f32 %v894, %v1235
        %v1237 = vand.u32 %v1236, 4294901760
        %1238 = vmatmul.f32.gmra.mxu0 %v1237
        %v1239 = vpop.f32.mrf.mxu0
        %v1240 = vadd.f32 %v1163, %v1239
        %v1241 = vand.u32 %v897, 4294901760
        %v1242 = vsub.f32 %v897, %v1241
        %v1243 = vand.u32 %v1242, 4294901760
        %1244 = vmatmul.f32.gmra.mxu0 %v1243
        %v1245 = vpop.f32.mrf.mxu0
        %v1246 = vadd.f32 %v1168, %v1245
        %v1247 = vand.u32 %v900, 4294901760
        %v1248 = vsub.f32 %v900, %v1247
        %v1249 = vand.u32 %v1248, 4294901760
        %1250 = vmatmul.f32.gmra.mxu0 %v1249
        %v1251 = vpop.f32.mrf.mxu0
        %v1252 = vadd.f32 %v1173, %v1251
        %v1253 = vand.u32 %v903, 4294901760
        %v1254 = vsub.f32 %v903, %v1253
        %v1255 = vand.u32 %v1254, 4294901760
        %1256 = vmatmul.f32.gmra.mxu0 %v1255
        %v1257 = vpop.f32.mrf.mxu0
        %v1258 = vadd.f32 %v1178, %v1257
        %v1259 = vand.u32 %v906, 4294901760
        %v1260 = vsub.f32 %v906, %v1259
        %v1261 = vand.u32 %v1260, 4294901760
        %1262 = vmatmul.f32.gmra.mxu0 %v1261
        %v1263 = vpop.f32.mrf.mxu0
        %v1264 = vadd.f32 %v1183, %v1263
        %v1265 = vand.u32 %v909, 4294901760
        %v1266 = vsub.f32 %v909, %v1265
        %v1267 = vand.u32 %v1266, 4294901760
        %1268 = vmatmul.f32.gmra.mxu0 %v1267
        %v1269 = vpop.f32.mrf.mxu0
        %v1270 = vadd.f32 %v1188, %v1269
        %v1271 = vand.u32 %v912, 4294901760
        %v1272 = vsub.f32 %v912, %v1271
        %v1273 = vand.u32 %v1272, 4294901760
        %1274 = vmatmul.f32.gmra.mxu0 %v1273
        %v1275 = vpop.f32.mrf.mxu0
        %v1276 = vadd.f32 %v1193, %v1275
        %v1277 = vand.u32 %v915, 4294901760
        %v1278 = vsub.f32 %v915, %v1277
        %v1279 = vand.u32 %v1278, 4294901760
        %1280 = vmatmul.f32.gmra.mxu0 %v1279
        %v1281 = vpop.f32.mrf.mxu0
        %v1282 = vadd.f32 %v1198, %v1281
        %v1283 = vand.u32 %v918, 4294901760
        %v1284 = vsub.f32 %v918, %v1283
        %v1285 = vand.u32 %v1284, 4294901760
        %1286 = vmatmul.f32.gmra.mxu0 %v1285
        %v1287 = vpop.f32.mrf.mxu0
        %v1288 = vadd.f32 %v1203, %v1287
        %1289 = vdwg.mxu0
        %1290 = vmatpush.msra.mxu0 0.0
        %1291 = vmatpush.msra.mxu0 0.0
        %1292 = vmatpush.msra.mxu0 0.0
        %1293 = vmatpush.msra.mxu0 0.0
        %1294 = vmatpush.msra.mxu0 0.0
        %1295 = vmatpush.msra.mxu0 0.0
        %1296 = vmatpush.msra.mxu0 0.0
        %1297 = vmatpush.msra.mxu0 0.0
        %v1298 = vand.u32 %v888, 4294901760
        %v1299 = vsub.f32 %v888, %v1298
        %v1300 = vand.u32 %v1299, 4294901760
        %1301 = vmatpush.msra.mxu0 %v1300
        %v1302 = vand.u32 %v887, 4294901760
        %v1303 = vsub.f32 %v887, %v1302
        %v1304 = vand.u32 %v1303, 4294901760
        %1305 = vmatpush.msra.mxu0 %v1304
        %v1306 = vand.u32 %v886, 4294901760
        %v1307 = vsub.f32 %v886, %v1306
        %v1308 = vand.u32 %v1307, 4294901760
        %1309 = vmatpush.msra.mxu0 %v1308
        %v1310 = vand.u32 %v885, 4294901760
        %v1311 = vsub.f32 %v885, %v1310
        %v1312 = vand.u32 %v1311, 4294901760
        %1313 = vmatpush.msra.mxu0 %v1312
        %v1314 = vand.u32 %v884, 4294901760
        %v1315 = vsub.f32 %v884, %v1314
        %v1316 = vand.u32 %v1315, 4294901760
        %1317 = vmatpush.msra.mxu0 %v1316
        %v1318 = vand.u32 %v883, 4294901760
        %v1319 = vsub.f32 %v883, %v1318
        %v1320 = vand.u32 %v1319, 4294901760
        %1321 = vmatpush.msra.mxu0 %v1320
        %v1322 = vand.u32 %v882, 4294901760
        %v1323 = vsub.f32 %v882, %v1322
        %v1324 = vand.u32 %v1323, 4294901760
        %1325 = vmatpush.msra.mxu0 %v1324
        %v1326 = vand.u32 %v881, 4294901760
        %v1327 = vsub.f32 %v881, %v1326
        %v1328 = vand.u32 %v1327, 4294901760
        %1329 = vmatpush.msra.mxu0 %v1328
        %v1330 = vand.u32 %v891, 4294901760
        %1331 = vmatmul.f32.gmra.mxu0 %v1330
        %v1332 = vpop.f32.mrf.mxu0
        %v1333 = vadd.f32 %v1234, %v1332
        %v1334 = vand.u32 %v894, 4294901760
        %1335 = vmatmul.f32.gmra.mxu0 %v1334
        %v1336 = vpop.f32.mrf.mxu0
        %v1337 = vadd.f32 %v1240, %v1336
        %v1338 = vand.u32 %v897, 4294901760
        %1339 = vmatmul.f32.gmra.mxu0 %v1338
        %v1340 = vpop.f32.mrf.mxu0
        %v1341 = vadd.f32 %v1246, %v1340
        %v1342 = vand.u32 %v900, 4294901760
        %1343 = vmatmul.f32.gmra.mxu0 %v1342
        %v1344 = vpop.f32.mrf.mxu0
        %v1345 = vadd.f32 %v1252, %v1344
        %v1346 = vand.u32 %v903, 4294901760
        %1347 = vmatmul.f32.gmra.mxu0 %v1346
        %v1348 = vpop.f32.mrf.mxu0
        %v1349 = vadd.f32 %v1258, %v1348
        %v1350 = vand.u32 %v906, 4294901760
        %1351 = vmatmul.f32.gmra.mxu0 %v1350
        %v1352 = vpop.f32.mrf.mxu0
        %v1353 = vadd.f32 %v1264, %v1352
        %v1354 = vand.u32 %v909, 4294901760
        %1355 = vmatmul.f32.gmra.mxu0 %v1354
        %v1356 = vpop.f32.mrf.mxu0
        %v1357 = vadd.f32 %v1270, %v1356
        %v1358 = vand.u32 %v912, 4294901760
        %1359 = vmatmul.f32.gmra.mxu0 %v1358
        %v1360 = vpop.f32.mrf.mxu0
        %v1361 = vadd.f32 %v1276, %v1360
        %v1362 = vand.u32 %v915, 4294901760
        %1363 = vmatmul.f32.gmra.mxu0 %v1362
        %v1364 = vpop.f32.mrf.mxu0
        %v1365 = vadd.f32 %v1282, %v1364
        %v1366 = vand.u32 %v918, 4294901760
        %1367 = vmatmul.f32.gmra.mxu0 %v1366
        %v1368 = vpop.f32.mrf.mxu0
        %v1369 = vadd.f32 %v1288, %v1368
        %1370 = vdwg.mxu0
        %1371 = vmatpush.msra.mxu0 0.0
        %1372 = vmatpush.msra.mxu0 0.0
        %1373 = vmatpush.msra.mxu0 0.0
        %1374 = vmatpush.msra.mxu0 0.0
        %1375 = vmatpush.msra.mxu0 0.0
        %1376 = vmatpush.msra.mxu0 0.0
        %1377 = vmatpush.msra.mxu0 0.0
        %1378 = vmatpush.msra.mxu0 0.0
        %v1379 = vand.u32 %v888, 4294901760
        %1380 = vmatpush.msra.mxu0 %v1379
        %v1381 = vand.u32 %v887, 4294901760
        %1382 = vmatpush.msra.mxu0 %v1381
        %v1383 = vand.u32 %v886, 4294901760
        %1384 = vmatpush.msra.mxu0 %v1383
        %v1385 = vand.u32 %v885, 4294901760
        %1386 = vmatpush.msra.mxu0 %v1385
        %v1387 = vand.u32 %v884, 4294901760
        %1388 = vmatpush.msra.mxu0 %v1387
        %v1389 = vand.u32 %v883, 4294901760
        %1390 = vmatpush.msra.mxu0 %v1389
        %v1391 = vand.u32 %v882, 4294901760
        %1392 = vmatpush.msra.mxu0 %v1391
        %v1393 = vand.u32 %v881, 4294901760
        %1394 = vmatpush.msra.mxu0 %v1393
        %v1395 = vand.u32 %v891, 4294901760
        %1396 = vmatmul.f32.gmra.mxu0 %v1395
        %v1397 = vpop.f32.mrf.mxu0
        %v1398 = vadd.f32 %v1333, %v1397
        %v1399 = vand.u32 %v894, 4294901760
        %1400 = vmatmul.f32.gmra.mxu0 %v1399
        %v1401 = vpop.f32.mrf.mxu0
        %v1402 = vadd.f32 %v1337, %v1401
        %v1403 = vand.u32 %v897, 4294901760
        %1404 = vmatmul.f32.gmra.mxu0 %v1403
        %v1405 = vpop.f32.mrf.mxu0
        %v1406 = vadd.f32 %v1341, %v1405
        %v1407 = vand.u32 %v900, 4294901760
        %1408 = vmatmul.f32.gmra.mxu0 %v1407
        %v1409 = vpop.f32.mrf.mxu0
        %v1410 = vadd.f32 %v1345, %v1409
        %v1411 = vand.u32 %v903, 4294901760
        %1412 = vmatmul.f32.gmra.mxu0 %v1411
        %v1413 = vpop.f32.mrf.mxu0
        %v1414 = vadd.f32 %v1349, %v1413
        %v1415 = vand.u32 %v906, 4294901760
        %1416 = vmatmul.f32.gmra.mxu0 %v1415
        %v1417 = vpop.f32.mrf.mxu0
        %v1418 = vadd.f32 %v1353, %v1417
        %v1419 = vand.u32 %v909, 4294901760
        %1420 = vmatmul.f32.gmra.mxu0 %v1419
        %v1421 = vpop.f32.mrf.mxu0
        %v1422 = vadd.f32 %v1357, %v1421
        %v1423 = vand.u32 %v912, 4294901760
        %1424 = vmatmul.f32.gmra.mxu0 %v1423
        %v1425 = vpop.f32.mrf.mxu0
        %v1426 = vadd.f32 %v1361, %v1425
        %v1427 = vand.u32 %v915, 4294901760
        %1428 = vmatmul.f32.gmra.mxu0 %v1427
        %v1429 = vpop.f32.mrf.mxu0
        %v1430 = vadd.f32 %v1365, %v1429
        %v1431 = vand.u32 %v918, 4294901760
        %1432 = vmatmul.f32.gmra.mxu0 %v1431
        %v1433 = vpop.f32.mrf.mxu0
        %v1434 = vadd.f32 %v1369, %v1433
        %1435 = vdwg.mxu0
        %v1436 = vmul.f32 %v1398, %v1398
        %v1437 = vmul.f32 %v1402, %v1402
        %v1438 = vmul.f32 %v1406, %v1406
        %v1439 = vmul.f32 %v1410, %v1410
        %v1440 = vmul.f32 %v1398, %v1406
        %v1441 = vmul.f32 %v1402, %v1410
        %v1442 = vsub.f32 %v1414, %v1436
        %v1443 = vsub.f32 %v1418, %v1437
        %v1444 = vsub.f32 %v1422, %v1438
        %v1445 = vsub.f32 %v1426, %v1439
        %v1446 = vsub.f32 %v1430, %v1440
        %v1447 = vsub.f32 %v1434, %v1441
        %v1448 = vmul.f32 %v1440, 2.0
        %v1449 = vmul.f32 %v1441, 2.0
        %v1450 = vadd.f32 %v1448, 0.0001
        %v1451 = vadd.f32 %v1449, 0.0001
        %v1452 = vmul.f32 %v1446, 2.0
        %v1453 = vmul.f32 %v1447, 2.0
        %v1454 = vadd.f32 %v1452, 0.0009
        %v1455 = vadd.f32 %v1453, 0.0009
        %v1456 = vmul.f32 %v1450, %v1454
        %v1457 = vmul.f32 %v1451, %v1455
        %v1458 = vadd.f32 %v1436, %v1438
        %v1459 = vadd.f32 %v1437, %v1439
        %v1460 = vadd.f32 %v1458, 0.0001
        %v1461 = vadd.f32 %v1459, 0.0001
        %v1462 = vadd.f32 %v1442, %v1444
        %v1463 = vadd.f32 %v1443, %v1445
        %v1464 = vadd.f32 %v1462, 0.0009
        %v1465 = vadd.f32 %v1463, 0.0009
        %v1466 = vmul.f32 %v1460, %v1464
        %v1467 = vmul.f32 %v1461, %v1465
        %v1468 = vrcp.pop %v1466
        %v1469 = vrcp.pop %v1467
        %v1470 = vmul.f32 %v1466, %v1468
        %v1471 = vmul.f32 %v1467, %v1469
        %v1472 = vsub.f32 2.0, %v1470
        %v1473 = vsub.f32 2.0, %v1471
        %v1474 = vmul.f32 %v1468, %v1472
        %v1475 = vmul.f32 %v1469, %v1473
        %v1476 = vmul.f32 %v1456, %v1474
        %v1477 = vmul.f32 %v1457, %v1475
        %v1478 = vadd.f32 %v1476, %v1477
        %1479 = vst.msk [vmem:[%s287] sm:$0xff] %vm889, %v1478
        %s1480 = sand.u32 %s122, 1
        %s1481 = scalar_lea.sflag [#allocation4], %s1480
        %s1482 = sand.u32 %s122, 1
        %s1483 = smul.addr %s1482, 8
        %s1484 = scalar_lea.vmem [#allocation9], %s1483
        // Predicated region
        $region53: #{tpu_custom_call.1} parent=35 // pred_check
          %p1485 = pneg %p132
        $region54: #{tpu_custom_call.1} parent=35 // pred_check_branch
          %1487 = sbr.rel (%p1485) target = $region56
        $region55: #{tpu_custom_call.1} parent=35 // pred_region
          %1489 = vsyncadd %s1481, 0
          %s1490 = smul.addr %s20, 8
          %s1491 = scalar_lea.hbm %s4, %s1490
          %s1493 = sshll.u32 %s1484, 4
          %s1494 = int_to_ptr.vmem [resolvable:$true] %s1493
          %s1495 = sshll.u32 %s1491, 4
          %s1496 = int_to_ptr.hbm [resolvable:$true] %s1495
          %1498 = dma.vmem_to_hbm [thread:$0]  %s1494, 128, %s1496, %s1481
        $region56: #{tpu_custom_call.1} parent=35 // pred_fallthru
          _
      $region36: #{tpu_custom_call.1} parent=5 // pred_fallthru
        _
      %p1499 = scmp.le.s32.totalorder 2, %s15
      // Predicated region
      $region57: #{tpu_custom_call.1} parent=5 // pred_check
        %p1500 = pneg %p1499
      $region58: #{tpu_custom_call.1} parent=5 // pred_check_branch
        %1502 = sbr.rel (%p1500) target = $region60
      $region59: #{tpu_custom_call.1} parent=5 // pred_region
        %s1503 = ssub.s32 %s15, 2
        // Predicated region
        $region61: #{tpu_custom_call.1} parent=59 // pred_check
          %p1504 = pneg %p138
        $region62: #{tpu_custom_call.1} parent=59 // pred_check_branch
          %1506 = sbr.rel (%p1504) target = $region64
        $region63: #{tpu_custom_call.1} parent=59 // pred_region
          %s1507 = sand.u32 %s123, 1
          %s1508 = scalar_lea.sflag [#allocation4], %s1507
          %s1509 = sand.u32 %s123, 1
          %s1510 = smul.addr %s1509, 8
          %s1511 = scalar_lea.vmem [#allocation9], %s1510
          %1513 = dma.done %s1508, 128
        $region64: #{tpu_custom_call.1} parent=59 // pred_fallthru
          _
      $region60: #{tpu_custom_call.1} parent=5 // pred_fallthru
        _
    $region6: #{tpu_custom_call.1} parent=1 // loop_footer
      %s19 = sadd.s32 1, %s15
    $region7: #{tpu_custom_call.1} parent=1 // loop_footer_branch
      %14 = sbr.rel target = $region3
    $region8: #{tpu_custom_call.1} parent=1 // loop_exit
      _
    %1514 = vsyncpa [#allocation3], 1
    %s1515 = scalar_lea.sflag [#allocation3], 1
    %1516 = vsyncpa %s1515, 1
    %1517 = vsyncpa [#allocation6], 1
    %1518 = vsyncpa [#allocation4], 1
    %s1519 = scalar_lea.sflag [#allocation4], 1
    %1520 = vsyncpa %s1519, 1

</llo_original>
